<compile_context>
chip_gen: v6e
topology: v6e:2x2x1
jax: 0.10.0
libtpu: 0.0.40
codegen_flags: <defaults>
</compile_context>

<pallas_src>
import jax
import jax.numpy as jnp
import numpy as np
from jax.experimental import pallas as pl
from jax.experimental.pallas import tpu as pltpu


# ---------------------------------------------------------------------------
# Pallas kernel
# ---------------------------------------------------------------------------
def _make_decoder_kernel(B, Tenc, Din, H, A, K, dim_out, sos_id,
                         temperature, max_step, mm_dtype):
    f_pad = (K - 1) // 2
    f32 = jnp.float32

    def kernel(enc_ref, negb_ref, att0_ref, embg_ref, vT_ref, whall_ref,
               cwua_ref, ub_ref, watt_ref, batt_ref, wc_ref, blstm_ref,
               wo_ref, bo_ref, out_ref, attm_ref):
        enc = enc_ref[...]            # (B, Tenc, Din)   mm_dtype
        neg_bias = negb_ref[...]      # (B, Tenc)        f32, 0 valid / -1e30 pad
        att0 = att0_ref[...]          # (B, Tenc)        f32
        emb_gate = embg_ref[...]      # (dim_out, 4H)    mm_dtype = emb @ W_ih[:, :H].T
        vT = vT_ref[...]              # (Din, A)         mm_dtype
        w_h_all = whall_ref[...]      # (H, A + 4H)      mm_dtype = [W_dec.T | W_hh.T]
        cw_ua = cwua_ref[...]         # (K, 1, A)        f32 (conv_w folded with U_w)
        ub3 = ub_ref[...][None]       # (1, 1, A)        f32
        watt3 = watt_ref[...][None]   # (1, 1, A)
        batt = batt_ref[...]          # (1, 1)
        w_c = wc_ref[...]             # (Din, 4H)
        blstm = blstm_ref[...]        # (1, 4H)
        wo = wo_ref[...]              # (H, dim_out)
        bo = bo_ref[...]              # (1, dim_out)

        # ---- encoder projection, once: per-batch 2-D MXU matmuls ----------
        proj_enc = jnp.stack(
            [jnp.dot(enc[b], vT, preferred_element_type=f32) for b in range(B)],
            axis=0)                                            # (B, Tenc, A) f32

        # ---- loop-invariant constants hoisted out of the decode loop ------
        cw_rows = [cw_ua[k][None, :, :] for k in range(K)]     # each (1, 1, A)
        zpad = jnp.zeros((B, f_pad), f32) if f_pad > 0 else None

        tok0 = jnp.full((B, 1), sos_id, dtype=jnp.int32)
        h0 = jnp.zeros((B, H), f32)
        c0 = jnp.zeros((B, H), f32)

        def step(i, carry):
            tok, h, c, prev_att = carry

            # Fused h-projections: [attention dec-proj | LSTM recurrent gates].
            hW = jnp.dot(h.astype(mm_dtype), w_h_all,
                         preferred_element_type=f32)           # (B, A + 4H)
            proj_dec = hW[:, :A]                               # (B, A)
            gates_h = hW[:, A:]                                # (B, 4H)

            # Location conv fused with U-projection: K register shifts + FMA
            # (no scratch buffer, no per-step masked stores).
            if f_pad > 0:
                padded = jnp.concatenate([zpad, prev_att, zpad], axis=1)
            else:
                padded = prev_att                              # (B, Tenc + 2*f_pad)
            proj_att = padded[:, 0:Tenc][:, :, None] * cw_rows[0]
            for k in range(1, K):
                proj_att = proj_att + padded[:, k:k + Tenc][:, :, None] * cw_rows[k]

            e = jnp.tanh(proj_dec[:, None, :] + proj_enc + proj_att + ub3)
            score = jnp.sum(e * watt3, axis=-1) + batt         # (B, Tenc)
            s = temperature * score + neg_bias                 # mask AFTER temperature
            m = jnp.max(s, axis=1, keepdims=True)
            ex = jnp.exp(s - m)                                # padded lanes underflow to 0
            att_w = ex / jnp.sum(ex, axis=1, keepdims=True)    # (B, Tenc)

            # context = att_w @ enc  (batched MXU matmul, contraction over Tenc)
            ctx3 = jnp.einsum('bqt,btd->bqd',
                              att_w[:, None, :].astype(mm_dtype), enc,
                              preferred_element_type=f32)      # (B, 1, Din)
            context = jnp.sum(ctx3, axis=1)                    # (B, Din)

            # Token one-hot fused with the (embedding -> gates) projection.
            # TODO(synk): for a production-size vocabulary replace this one-hot
            #             matmul with a per-row gather / small DMA of emb_gate rows.
            oh = (jax.lax.broadcasted_iota(jnp.int32, (B, dim_out), 1)
                  == tok).astype(mm_dtype)
            gates = (jnp.dot(oh, emb_gate, preferred_element_type=f32)
                     + jnp.dot(context.astype(mm_dtype), w_c,
                               preferred_element_type=f32)
                     + gates_h + blstm)                        # (B, 4H)
            i_g = jax.nn.sigmoid(gates[:, 0:H])
            f_g = jax.nn.sigmoid(gates[:, H:2 * H])
            g_g = jnp.tanh(gates[:, 2 * H:3 * H])
            o_g = jax.nn.sigmoid(gates[:, 3 * H:4 * H])
            c_new = f_g * c + i_g * g_g
            h_new = o_g * jnp.tanh(c_new)

            logits = (jnp.dot(h_new.astype(mm_dtype), wo,
                              preferred_element_type=f32) + bo)  # (B, dim_out)

            # Time-major stores: dynamic index on the leading (untiled) axis.
            # (At production widths dim_out/Tenc >= 128 these rows are lane-dense.)
            out_ref[i] = logits
            attm_ref[i] = att_w

            # Greedy next token (first arg-max, like torch.max).
            mx = jnp.max(logits, axis=1, keepdims=True)
            idxs = jax.lax.broadcasted_iota(jnp.int32, (B, dim_out), 1)
            cand = jnp.where(logits == mx, idxs, dim_out)
            tok_new = jnp.min(cand, axis=1, keepdims=True).astype(jnp.int32)

            return tok_new, h_new, c_new, att_w

        jax.lax.fori_loop(0, max_step, step, (tok0, h0, c0, att0))

    return kernel


# ---------------------------------------------------------------------------
# Wrapper (one-time weight fusion + pallas_call)
# ---------------------------------------------------------------------------
def decoder_forward(enc_sequence, enc_lengths, params, *, sos_id,
                    att_temperature=1.0, matmul_dtype=jnp.float32):
    """Greedy-decoding forward pass (the label_sequence=None branch)."""
    # TODO(synk): teacher-forcing branch (label_sequence != None) not implemented.
    # TODO(synk): num_layers is fixed to 1 (the module's default).
    # TODO(synk): v7x: shard the batch across the 2 TensorCores (grid over batch
    #             halves, dimension_semantics=("parallel",)) and stream the two
    #             outputs to HBM with per-step async copies at production
    #             Tenc/dim_out; unnecessary at these toy shapes.
    B, Tenc, Din = enc_sequence.shape
    dim_out, H = params['emb'].shape
    A = params['V_w'].shape[0]
    Fn, _, K = params['conv_w'].shape
    max_step = Tenc                      # inference: max_step = enc_sequence.size(1)

    f32 = jnp.float32
    mm = matmul_dtype                    # bf16 recommended on v5e/v6e; f32 keeps
                                         # exact parity with the PyTorch module.

    mask = (jnp.arange(Tenc, dtype=jnp.int32)[None, :]
            < enc_lengths[:, None]).astype(f32)                  # (B, Tenc)
    neg_bias = jnp.where(mask > 0.0, 0.0, -1e30).astype(f32)     # additive mask bias
    att0 = mask * (1.0 / Tenc)           # uniform initial attention over valid frames
    # NOTE: att0 matches the reference behaviour; padded rows sum to len/Tenc.

    # -- one-time weight fusion (plain JAX glue, off the hot path) -----------
    vT = params['V_w'].T.astype(mm)                              # (Din, A)
    w_h_all = jnp.concatenate([params['W_dec'].T, params['W_hh'].T],
                              axis=1).astype(mm)                 # (H, A + 4H)
    cw_ua = jnp.einsum('fk,af->ka', params['conv_w'][:, 0, :],
                       params['U_w'])[:, None, :].astype(f32)    # (K, 1, A)
    ub = params['U_b'][None, :].astype(f32)                      # (1, A)
    watt = params['att_out_w'].astype(f32)                       # (1, A)
    batt = params['att_out_b'].reshape(1, 1).astype(f32)         # (1, 1)
    emb_gate = (params['emb'] @ params['W_ih'][:, :H].T).astype(mm)  # (dim_out, 4H)
    w_c = params['W_ih'][:, H:].T.astype(mm)                     # (Din, 4H)
    blstm = (params['b_ih'] + params['b_hh'])[None, :].astype(f32)   # (1, 4H)
    wo = params['W_o'].T.astype(mm)                              # (H, dim_out)
    bo = params['b_o'][None, :].astype(f32)                      # (1, dim_out)

    kernel = _make_decoder_kernel(B, Tenc, Din, H, A, K, dim_out, int(sos_id),
                                  float(att_temperature), max_step, mm)

    vmem = pl.BlockSpec(memory_space=pltpu.MemorySpace.VMEM)
    out_t, att_t = pl.pallas_call(
        kernel,
        out_shape=(jax.ShapeDtypeStruct((max_step, B, dim_out), f32),
                   jax.ShapeDtypeStruct((max_step, B, Tenc), f32)),
        in_specs=[vmem] * 14,
        out_specs=(vmem, vmem),
        compiler_params=pltpu.CompilerParams(vmem_limit_bytes=32 * 1024 * 1024),
    )(enc_sequence.astype(mm), neg_bias, att0, emb_gate, vT, w_h_all, cw_ua,
      ub, watt, batt, w_c, blstm, wo, bo)

    output = jnp.transpose(out_t, (1, 0, 2))       # (B, max_step, dim_out)
    att_matrix = jnp.transpose(att_t, (1, 0, 2))   # (B, max_step, Tenc)
    return output, att_matrix


# ---------------------------------------------------------------------------
# Pure-JAX reference (mirrors the PyTorch forward) for a sanity check
# ---------------------------------------------------------------------------
def decoder_reference(enc, lengths, p, sos_id, temperature):
    B, Tenc, Din = enc.shape
    dim_out, H = p['emb'].shape
    Fn, _, K = p['conv_w'].shape
    f_pad = (K - 1) // 2
    mask_valid = jnp.arange(Tenc)[None, :] < lengths[:, None]
    proj_enc = enc @ p['V_w'].T
    prev_att = jnp.where(mask_valid, 1.0 / Tenc, 0.0)
    h = jnp.zeros((B, H)); c = jnp.zeros((B, H))
    tok = jnp.full((B,), sos_id, jnp.int32)
    outs, atts = [], []
    for _ in range(Tenc):
        pa = jnp.pad(prev_att, ((0, 0), (f_pad, f_pad)))
        conv = jnp.stack(
            [sum(pa[:, k:k + Tenc] * p['conv_w'][f, 0, k] for k in range(K))
             for f in range(Fn)], axis=-1)                      # (B, Tenc, Fn)
        proj_att = conv @ p['U_w'].T + p['U_b']
        proj_dec = h @ p['W_dec'].T
        e = jnp.tanh(proj_dec[:, None, :] + proj_enc + proj_att)
        score = e @ p['att_out_w'][0] + p['att_out_b'][0]
        score = jnp.where(mask_valid, score, -jnp.inf)
        att_w = jax.nn.softmax(temperature * score, axis=1)
        context = jnp.sum(enc * att_w[:, :, None], axis=1)
        emb = p['emb'][tok]
        x = jnp.concatenate([emb, context], axis=1)
        gates = x @ p['W_ih'].T + h @ p['W_hh'].T + p['b_ih'] + p['b_hh']
        i_g = jax.nn.sigmoid(gates[:, :H]); f_g = jax.nn.sigmoid(gates[:, H:2 * H])
        g_g = jnp.tanh(gates[:, 2 * H:3 * H]); o_g = jax.nn.sigmoid(gates[:, 3 * H:])
        c = f_g * c + i_g * g_g
        h = o_g * jnp.tanh(c)
        logits = h @ p['W_o'].T + p['b_o']
        outs.append(logits); atts.append(att_w)
        tok = jnp.argmax(logits, axis=1).astype(jnp.int32)
        prev_att = att_w
    return jnp.stack(outs, axis=1), jnp.stack(atts, axis=1)


# ---------------------------------------------------------------------------
if __name__ == "__main__":
    key = jax.random.PRNGKey(0)
    B, Tenc, Din = 2, 16, 8            # dim_in = 8
    H, dim_out, A = 16, 8, 16          # dim_hidden, dim_out, dim_att
    fsize, Fn = 2, 4                   # att_filter_size, att_filter_num
    K = 2 * fsize + 1
    sos_id, temperature = 1, 1.0

    keys = jax.random.split(key, 16)
    s = 0.3
    params = {
        'emb':       s * jax.random.normal(keys[0], (dim_out, H), jnp.float32),
        'V_w':       s * jax.random.normal(keys[1], (A, Din), jnp.float32),
        'W_dec':     s * jax.random.normal(keys[2], (A, H), jnp.float32),
        'U_w':       s * jax.random.normal(keys[3], (A, Fn), jnp.float32),
        'U_b':       s * jax.random.normal(keys[4], (A,), jnp.float32),
        'conv_w':    s * jax.random.normal(keys[5], (Fn, 1, K), jnp.float32),
        'att_out_w': s * jax.random.normal(keys[6], (1, A), jnp.float32),
        'att_out_b': s * jax.random.normal(keys[7], (1,), jnp.float32),
        'W_ih':      s * jax.random.normal(keys[8], (4 * H, H + Din), jnp.float32),
        'W_hh':      s * jax.random.normal(keys[9], (4 * H, H), jnp.float32),
        'b_ih':      s * jax.random.normal(keys[10], (4 * H,), jnp.float32),
        'b_hh':      s * jax.random.normal(keys[11], (4 * H,), jnp.float32),
        'W_o':       s * jax.random.normal(keys[12], (dim_out, H), jnp.float32),
        'b_o':       s * jax.random.normal(keys[13], (dim_out,), jnp.float32),
    }
    enc_sequence = jax.random.normal(keys[14], (B, Tenc, Din), jnp.float32)
    enc_lengths = jnp.array([Tenc, 11], dtype=jnp.int32)

    output, att_matrix = decoder_forward(enc_sequence, enc_lengths, params,
                                         sos_id=sos_id,
                                         att_temperature=temperature)
    output, att_matrix = jax.block_until_ready((output, att_matrix))

    assert output.shape == (B, Tenc, dim_out)
    assert att_matrix.shape == (B, Tenc, Tenc)

    ref_out, ref_att = decoder_reference(enc_sequence, enc_lengths, params,
                                         sos_id, temperature)
    np.testing.assert_allclose(np.asarray(output), np.asarray(ref_out),
                               rtol=2e-2, atol=2e-2)
    np.testing.assert_allclose(np.asarray(att_matrix), np.asarray(ref_att),
                               rtol=2e-2, atol=2e-2)

    print("KERNEL_OK")
</pallas_src>

<mosaic_0001>
module attributes {stable_mosaic.version = 11 : i64} {
  func.func @kernel(%arg0: memref<2x16x8xf32, #tpu.memory_space<vmem>>, %arg1: memref<2x16xf32, #tpu.memory_space<vmem>>, %arg2: memref<2x16xf32, #tpu.memory_space<vmem>>, %arg3: memref<8x64xf32, #tpu.memory_space<vmem>>, %arg4: memref<8x16xf32, #tpu.memory_space<vmem>>, %arg5: memref<16x80xf32, #tpu.memory_space<vmem>>, %arg6: memref<5x1x16xf32, #tpu.memory_space<vmem>>, %arg7: memref<1x16xf32, #tpu.memory_space<vmem>>, %arg8: memref<1x16xf32, #tpu.memory_space<vmem>>, %arg9: memref<1x1xf32, #tpu.memory_space<vmem>>, %arg10: memref<8x64xf32, #tpu.memory_space<vmem>>, %arg11: memref<1x64xf32, #tpu.memory_space<vmem>>, %arg12: memref<16x8xf32, #tpu.memory_space<vmem>>, %arg13: memref<1x8xf32, #tpu.memory_space<vmem>>, %arg14: memref<16x2x8xf32, #tpu.memory_space<vmem>>, %arg15: memref<16x2x16xf32, #tpu.memory_space<vmem>>) attributes {dimension_semantics = [], scalar_prefetch = 0 : i64, scratch_operands = 0 : i64, tpu.core_type = #tpu.core_type<tc>} {
    %c0 = arith.constant 0 : index
    %c0_0 = arith.constant 0 : index
    %c0_1 = arith.constant 0 : index
    %0 = vector.load %arg0[%c0, %c0_0, %c0_1] : memref<2x16x8xf32, #tpu.memory_space<vmem>>, vector<2x16x8xf32>
    %c0_2 = arith.constant 0 : index
    %c0_3 = arith.constant 0 : index
    %1 = vector.load %arg1[%c0_2, %c0_3] : memref<2x16xf32, #tpu.memory_space<vmem>>, vector<2x16xf32>
    %c0_4 = arith.constant 0 : index
    %c0_5 = arith.constant 0 : index
    %2 = vector.load %arg2[%c0_4, %c0_5] : memref<2x16xf32, #tpu.memory_space<vmem>>, vector<2x16xf32>
    %c0_6 = arith.constant 0 : index
    %c0_7 = arith.constant 0 : index
    %3 = vector.load %arg3[%c0_6, %c0_7] : memref<8x64xf32, #tpu.memory_space<vmem>>, vector<8x64xf32>
    %c0_8 = arith.constant 0 : index
    %c0_9 = arith.constant 0 : index
    %4 = vector.load %arg4[%c0_8, %c0_9] : memref<8x16xf32, #tpu.memory_space<vmem>>, vector<8x16xf32>
    %c0_10 = arith.constant 0 : index
    %c0_11 = arith.constant 0 : index
    %5 = vector.load %arg5[%c0_10, %c0_11] : memref<16x80xf32, #tpu.memory_space<vmem>>, vector<16x80xf32>
    %c0_12 = arith.constant 0 : index
    %c0_13 = arith.constant 0 : index
    %c0_14 = arith.constant 0 : index
    %6 = vector.load %arg6[%c0_12, %c0_13, %c0_14] : memref<5x1x16xf32, #tpu.memory_space<vmem>>, vector<5x1x16xf32>
    %c0_15 = arith.constant 0 : index
    %c0_16 = arith.constant 0 : index
    %7 = vector.load %arg7[%c0_15, %c0_16] : memref<1x16xf32, #tpu.memory_space<vmem>>, vector<1x16xf32>
    %8 = vector.shape_cast %7 : vector<1x16xf32> to vector<1x1x16xf32>
    %c0_17 = arith.constant 0 : index
    %c0_18 = arith.constant 0 : index
    %9 = vector.load %arg8[%c0_17, %c0_18] : memref<1x16xf32, #tpu.memory_space<vmem>>, vector<1x16xf32>
    %10 = vector.shape_cast %9 : vector<1x16xf32> to vector<1x1x16xf32>
    %c0_19 = arith.constant 0 : index
    %c0_20 = arith.constant 0 : index
    %11 = vector.load %arg9[%c0_19, %c0_20] : memref<1x1xf32, #tpu.memory_space<vmem>>, vector<1x1xf32>
    %c0_21 = arith.constant 0 : index
    %c0_22 = arith.constant 0 : index
    %12 = vector.load %arg10[%c0_21, %c0_22] : memref<8x64xf32, #tpu.memory_space<vmem>>, vector<8x64xf32>
    %c0_23 = arith.constant 0 : index
    %c0_24 = arith.constant 0 : index
    %13 = vector.load %arg11[%c0_23, %c0_24] : memref<1x64xf32, #tpu.memory_space<vmem>>, vector<1x64xf32>
    %c0_25 = arith.constant 0 : index
    %c0_26 = arith.constant 0 : index
    %14 = vector.load %arg12[%c0_25, %c0_26] : memref<16x8xf32, #tpu.memory_space<vmem>>, vector<16x8xf32>
    %c0_27 = arith.constant 0 : index
    %c0_28 = arith.constant 0 : index
    %15 = vector.load %arg13[%c0_27, %c0_28] : memref<1x8xf32, #tpu.memory_space<vmem>>, vector<1x8xf32>
    %16 = vector.extract_strided_slice %0 {offsets = [0, 0, 0], sizes = [1, 16, 8], strides = [1, 1, 1]} : vector<2x16x8xf32> to vector<1x16x8xf32>
    %17 = vector.shape_cast %16 : vector<1x16x8xf32> to vector<16x8xf32>
    %cst = arith.constant dense<0.000000e+00> : vector<16x16xf32>
    %18 = tpu.matmul %17, %4, %cst {dimension_numbers = #tpu.dot_dimension_numbers<[1], [0], [0], [1], [0, 0, 1, 1], [], []>} : vector<16x8xf32>, vector<8x16xf32>, vector<16x16xf32> -> vector<16x16xf32>
    %19 = vector.extract_strided_slice %0 {offsets = [1, 0, 0], sizes = [1, 16, 8], strides = [1, 1, 1]} : vector<2x16x8xf32> to vector<1x16x8xf32>
    %20 = vector.shape_cast %19 : vector<1x16x8xf32> to vector<16x8xf32>
    %cst_29 = arith.constant dense<0.000000e+00> : vector<16x16xf32>
    %21 = tpu.matmul %20, %4, %cst_29 {dimension_numbers = #tpu.dot_dimension_numbers<[1], [0], [0], [1], [0, 0, 1, 1], [], []>} : vector<16x8xf32>, vector<8x16xf32>, vector<16x16xf32> -> vector<16x16xf32>
    %22 = vector.shape_cast %18 : vector<16x16xf32> to vector<1x16x16xf32>
    %23 = vector.shape_cast %21 : vector<16x16xf32> to vector<1x16x16xf32>
    %24 = tpu.concatenate %22, %23 in 0 : vector<1x16x16xf32>, vector<1x16x16xf32> -> vector<2x16x16xf32>
    %25 = vector.extract_strided_slice %6 {offsets = [0, 0, 0], sizes = [1, 1, 16], strides = [1, 1, 1]} : vector<5x1x16xf32> to vector<1x1x16xf32>
    %26 = vector.shape_cast %25 : vector<1x1x16xf32> to vector<1x16xf32>
    %27 = vector.shape_cast %26 : vector<1x16xf32> to vector<1x1x16xf32>
    %28 = vector.extract_strided_slice %6 {offsets = [1, 0, 0], sizes = [1, 1, 16], strides = [1, 1, 1]} : vector<5x1x16xf32> to vector<1x1x16xf32>
    %29 = vector.shape_cast %28 : vector<1x1x16xf32> to vector<1x16xf32>
    %30 = vector.shape_cast %29 : vector<1x16xf32> to vector<1x1x16xf32>
    %31 = vector.extract_strided_slice %6 {offsets = [2, 0, 0], sizes = [1, 1, 16], strides = [1, 1, 1]} : vector<5x1x16xf32> to vector<1x1x16xf32>
    %32 = vector.shape_cast %31 : vector<1x1x16xf32> to vector<1x16xf32>
    %33 = vector.shape_cast %32 : vector<1x16xf32> to vector<1x1x16xf32>
    %34 = vector.extract_strided_slice %6 {offsets = [3, 0, 0], sizes = [1, 1, 16], strides = [1, 1, 1]} : vector<5x1x16xf32> to vector<1x1x16xf32>
    %35 = vector.shape_cast %34 : vector<1x1x16xf32> to vector<1x16xf32>
    %36 = vector.shape_cast %35 : vector<1x16xf32> to vector<1x1x16xf32>
    %37 = vector.extract_strided_slice %6 {offsets = [4, 0, 0], sizes = [1, 1, 16], strides = [1, 1, 1]} : vector<5x1x16xf32> to vector<1x1x16xf32>
    %38 = vector.shape_cast %37 : vector<1x1x16xf32> to vector<1x16xf32>
    %39 = vector.shape_cast %38 : vector<1x16xf32> to vector<1x1x16xf32>
    %cst_30 = arith.constant 0.000000e+00 : f32
    %40 = vector.broadcast %cst_30 : f32 to vector<2x2xf32>
    %c1_i32 = arith.constant 1 : i32
    %41 = vector.broadcast %c1_i32 : i32 to vector<2x1xi32>
    %cst_31 = arith.constant 0.000000e+00 : f32
    %42 = vector.broadcast %cst_31 : f32 to vector<2x16xf32>
    %cst_32 = arith.constant 0.000000e+00 : f32
    %43 = vector.broadcast %cst_32 : f32 to vector<2x16xf32>
    %c0_i32 = arith.constant 0 : i32
    %c16_i32 = arith.constant 16 : i32
    %44 = arith.addi %c0_i32, %c16_i32 : i32
    %c1_i32_33 = arith.constant 1 : i32
    %45:4 = scf.for %arg16 = %c0_i32 to %44 step %c1_i32_33 iter_args(%arg17 = %41, %arg18 = %42, %arg19 = %43, %arg20 = %2) -> (vector<2x1xi32>, vector<2x16xf32>, vector<2x16xf32>, vector<2x16xf32>)  : i32 {
      %cst_35 = arith.constant dense<0.000000e+00> : vector<2x80xf32>
      %46 = tpu.matmul %arg18, %5, %cst_35 {dimension_numbers = #tpu.dot_dimension_numbers<[1], [0], [0], [1], [0, 0, 1, 1], [], []>} : vector<2x16xf32>, vector<16x80xf32>, vector<2x80xf32> -> vector<2x80xf32>
      %47 = vector.extract_strided_slice %46 {offsets = [0, 0], sizes = [2, 16], strides = [1, 1]} : vector<2x80xf32> to vector<2x16xf32>
      %48 = vector.extract_strided_slice %46 {offsets = [0, 16], sizes = [2, 64], strides = [1, 1]} : vector<2x80xf32> to vector<2x64xf32>
      %49 = tpu.concatenate %40, %arg20, %40 in 1 : vector<2x2xf32>, vector<2x16xf32>, vector<2x2xf32> -> vector<2x20xf32>
      %50 = vector.extract_strided_slice %49 {offsets = [0, 0], sizes = [2, 16], strides = [1, 1]} : vector<2x20xf32> to vector<2x16xf32>
      %51 = vector.shape_cast %50 : vector<2x16xf32> to vector<2x16x1xf32>
      %52 = vector.broadcast %51 : vector<2x16x1xf32> to vector<2x16x16xf32>
      %53 = vector.broadcast %27 : vector<1x1x16xf32> to vector<2x16x16xf32>
      %54 = arith.mulf %52, %53 : vector<2x16x16xf32>
      %55 = vector.extract_strided_slice %49 {offsets = [0, 1], sizes = [2, 16], strides = [1, 1]} : vector<2x20xf32> to vector<2x16xf32>
      %56 = vector.shape_cast %55 : vector<2x16xf32> to vector<2x16x1xf32>
      %57 = vector.broadcast %56 : vector<2x16x1xf32> to vector<2x16x16xf32>
      %58 = vector.broadcast %30 : vector<1x1x16xf32> to vector<2x16x16xf32>
      %59 = arith.mulf %57, %58 : vector<2x16x16xf32>
      %60 = arith.addf %54, %59 : vector<2x16x16xf32>
      %61 = vector.extract_strided_slice %49 {offsets = [0, 2], sizes = [2, 16], strides = [1, 1]} : vector<2x20xf32> to vector<2x16xf32>
      %62 = vector.shape_cast %61 : vector<2x16xf32> to vector<2x16x1xf32>
      %63 = vector.broadcast %62 : vector<2x16x1xf32> to vector<2x16x16xf32>
      %64 = vector.broadcast %33 : vector<1x1x16xf32> to vector<2x16x16xf32>
      %65 = arith.mulf %63, %64 : vector<2x16x16xf32>
      %66 = arith.addf %60, %65 : vector<2x16x16xf32>
      %67 = vector.extract_strided_slice %49 {offsets = [0, 3], sizes = [2, 16], strides = [1, 1]} : vector<2x20xf32> to vector<2x16xf32>
      %68 = vector.shape_cast %67 : vector<2x16xf32> to vector<2x16x1xf32>
      %69 = vector.broadcast %68 : vector<2x16x1xf32> to vector<2x16x16xf32>
      %70 = vector.broadcast %36 : vector<1x1x16xf32> to vector<2x16x16xf32>
      %71 = arith.mulf %69, %70 : vector<2x16x16xf32>
      %72 = arith.addf %66, %71 : vector<2x16x16xf32>
      %73 = vector.extract_strided_slice %49 {offsets = [0, 4], sizes = [2, 16], strides = [1, 1]} : vector<2x20xf32> to vector<2x16xf32>
      %74 = vector.shape_cast %73 : vector<2x16xf32> to vector<2x16x1xf32>
      %75 = vector.broadcast %74 : vector<2x16x1xf32> to vector<2x16x16xf32>
      %76 = vector.broadcast %39 : vector<1x1x16xf32> to vector<2x16x16xf32>
      %77 = arith.mulf %75, %76 : vector<2x16x16xf32>
      %78 = arith.addf %72, %77 : vector<2x16x16xf32>
      %79 = vector.shape_cast %47 : vector<2x16xf32> to vector<2x1x16xf32>
      %80 = vector.broadcast %79 : vector<2x1x16xf32> to vector<2x16x16xf32>
      %81 = arith.addf %80, %24 : vector<2x16x16xf32>
      %82 = arith.addf %81, %78 : vector<2x16x16xf32>
      %83 = vector.broadcast %8 : vector<1x1x16xf32> to vector<2x16x16xf32>
      %84 = arith.addf %82, %83 : vector<2x16x16xf32>
      %85 = math.tanh %84 : vector<2x16x16xf32>
      %86 = vector.broadcast %10 : vector<1x1x16xf32> to vector<2x16x16xf32>
      %87 = arith.mulf %85, %86 : vector<2x16x16xf32>
      %cst_36 = arith.constant dense<0.000000e+00> : vector<2x16xf32>
      %88 = vector.multi_reduction <add>, %87, %cst_36 [2] : vector<2x16x16xf32> to vector<2x16xf32>
      %89 = vector.broadcast %11 : vector<1x1xf32> to vector<2x16xf32>
      %90 = arith.addf %88, %89 : vector<2x16xf32>
      %cst_37 = arith.constant 1.000000e+00 : f32
      %91 = vector.broadcast %cst_37 : f32 to vector<2x16xf32>
      %92 = arith.mulf %91, %90 : vector<2x16xf32>
      %93 = arith.addf %92, %1 : vector<2x16xf32>
      %cst_38 = arith.constant dense<0xFF800000> : vector<2xf32>
      %94 = vector.multi_reduction <maximumf>, %93, %cst_38 [1] : vector<2x16xf32> to vector<2xf32>
      %95 = vector.shape_cast %94 : vector<2xf32> to vector<2x1xf32>
      %96 = vector.broadcast %95 : vector<2x1xf32> to vector<2x16xf32>
      %97 = arith.subf %93, %96 : vector<2x16xf32>
      %98 = math.exp %97 : vector<2x16xf32>
      %cst_39 = arith.constant dense<0.000000e+00> : vector<2xf32>
      %99 = vector.multi_reduction <add>, %98, %cst_39 [1] : vector<2x16xf32> to vector<2xf32>
      %100 = vector.shape_cast %99 : vector<2xf32> to vector<2x1xf32>
      %101 = vector.broadcast %100 : vector<2x1xf32> to vector<2x16xf32>
      %102 = arith.divf %98, %101 : vector<2x16xf32>
      %103 = vector.shape_cast %102 : vector<2x16xf32> to vector<2x1x16xf32>
      "tpu.trace_start"() <{level = 10 : i32, message = "bqt,btd->bqd"}> : () -> ()
      %cst_40 = arith.constant dense<0.000000e+00> : vector<2x1x8xf32>
      %104 = tpu.matmul %103, %0, %cst_40 {dimension_numbers = #tpu.dot_dimension_numbers<[2], [1], [1], [2], [0, 0, 0, 1, 1, 2], [0], [0]>} : vector<2x1x16xf32>, vector<2x16x8xf32>, vector<2x1x8xf32> -> vector<2x1x8xf32>
      "tpu.trace_stop"() : () -> ()
      %cst_41 = arith.constant dense<0.000000e+00> : vector<2x8xf32>
      %105 = vector.multi_reduction <add>, %104, %cst_41 [1] : vector<2x1x8xf32> to vector<2x8xf32>
      %106 = tpu.iota {dimensions = array<i32: 1>} : vector<2x8xi32>
      %107 = vector.broadcast %arg17 : vector<2x1xi32> to vector<2x8xi32>
      %108 = arith.cmpi eq, %106, %107 : vector<2x8xi32>
      %109 = arith.extui %108 : vector<2x8xi1> to vector<2x8xi32>
      %110 = arith.sitofp %109 : vector<2x8xi32> to vector<2x8xf32>
      %cst_42 = arith.constant dense<0.000000e+00> : vector<2x64xf32>
      %111 = tpu.matmul %110, %3, %cst_42 {dimension_numbers = #tpu.dot_dimension_numbers<[1], [0], [0], [1], [0, 0, 1, 1], [], []>} : vector<2x8xf32>, vector<8x64xf32>, vector<2x64xf32> -> vector<2x64xf32>
      %cst_43 = arith.constant dense<0.000000e+00> : vector<2x64xf32>
      %112 = tpu.matmul %105, %12, %cst_43 {dimension_numbers = #tpu.dot_dimension_numbers<[1], [0], [0], [1], [0, 0, 1, 1], [], []>} : vector<2x8xf32>, vector<8x64xf32>, vector<2x64xf32> -> vector<2x64xf32>
      %113 = arith.addf %111, %112 : vector<2x64xf32>
      %114 = arith.addf %113, %48 : vector<2x64xf32>
      %115 = vector.broadcast %13 : vector<1x64xf32> to vector<2x64xf32>
      %116 = arith.addf %114, %115 : vector<2x64xf32>
      %117 = vector.extract_strided_slice %116 {offsets = [0, 0], sizes = [2, 16], strides = [1, 1]} : vector<2x64xf32> to vector<2x16xf32>
      %118 = arith.negf %117 : vector<2x16xf32>
      %119 = math.exp %118 : vector<2x16xf32>
      %cst_44 = arith.constant 1.000000e+00 : f32
      %120 = vector.broadcast %cst_44 : f32 to vector<2x16xf32>
      %121 = arith.addf %120, %119 : vector<2x16xf32>
      %122 = arith.divf %120, %121 : vector<2x16xf32>
      %123 = vector.extract_strided_slice %116 {offsets = [0, 16], sizes = [2, 16], strides = [1, 1]} : vector<2x64xf32> to vector<2x16xf32>
      %124 = arith.negf %123 : vector<2x16xf32>
      %125 = math.exp %124 : vector<2x16xf32>
      %cst_45 = arith.constant 1.000000e+00 : f32
      %126 = vector.broadcast %cst_45 : f32 to vector<2x16xf32>
      %127 = arith.addf %126, %125 : vector<2x16xf32>
      %128 = arith.divf %126, %127 : vector<2x16xf32>
      %129 = vector.extract_strided_slice %116 {offsets = [0, 32], sizes = [2, 16], strides = [1, 1]} : vector<2x64xf32> to vector<2x16xf32>
      %130 = math.tanh %129 : vector<2x16xf32>
      %131 = vector.extract_strided_slice %116 {offsets = [0, 48], sizes = [2, 16], strides = [1, 1]} : vector<2x64xf32> to vector<2x16xf32>
      %132 = arith.negf %131 : vector<2x16xf32>
      %133 = math.exp %132 : vector<2x16xf32>
      %cst_46 = arith.constant 1.000000e+00 : f32
      %134 = vector.broadcast %cst_46 : f32 to vector<2x16xf32>
      %135 = arith.addf %134, %133 : vector<2x16xf32>
      %136 = arith.divf %134, %135 : vector<2x16xf32>
      %137 = arith.mulf %128, %arg19 : vector<2x16xf32>
      %138 = arith.mulf %122, %130 : vector<2x16xf32>
      %139 = arith.addf %137, %138 : vector<2x16xf32>
      %140 = math.tanh %139 : vector<2x16xf32>
      %141 = arith.mulf %136, %140 : vector<2x16xf32>
      %cst_47 = arith.constant dense<0.000000e+00> : vector<2x8xf32>
      %142 = tpu.matmul %141, %14, %cst_47 {dimension_numbers = #tpu.dot_dimension_numbers<[1], [0], [0], [1], [0, 0, 1, 1], [], []>} : vector<2x16xf32>, vector<16x8xf32>, vector<2x8xf32> -> vector<2x8xf32>
      %143 = vector.broadcast %15 : vector<1x8xf32> to vector<2x8xf32>
      %144 = arith.addf %142, %143 : vector<2x8xf32>
      %145 = arith.index_cast %arg16 : i32 to index
      %c0_48 = arith.constant 0 : index
      %c0_49 = arith.constant 0 : index
      %146 = vector.load %arg14[%145, %c0_48, %c0_49] : memref<16x2x8xf32, #tpu.memory_space<vmem>>, vector<1x2x8xf32>
      %147 = vector.shape_cast %146 : vector<1x2x8xf32> to vector<2x8xf32>
      %148 = vector.shape_cast %144 : vector<2x8xf32> to vector<1x2x8xf32>
      tpu.vector_store %arg14[%145, %c0_48, %c0_49], %148 {strides = array<i32>} : memref<16x2x8xf32, #tpu.memory_space<vmem>>, vector<1x2x8xf32>,
      %149 = arith.index_cast %arg16 : i32 to index
      %c0_50 = arith.constant 0 : index
      %c0_51 = arith.constant 0 : index
      %150 = vector.load %arg15[%149, %c0_50, %c0_51] : memref<16x2x16xf32, #tpu.memory_space<vmem>>, vector<1x2x16xf32>
      %151 = vector.shape_cast %150 : vector<1x2x16xf32> to vector<2x16xf32>
      %152 = vector.shape_cast %102 : vector<2x16xf32> to vector<1x2x16xf32>
      tpu.vector_store %arg15[%149, %c0_50, %c0_51], %152 {strides = array<i32>} : memref<16x2x16xf32, #tpu.memory_space<vmem>>, vector<1x2x16xf32>,
      %cst_52 = arith.constant dense<0xFF800000> : vector<2xf32>
      %153 = vector.multi_reduction <maximumf>, %144, %cst_52 [1] : vector<2x8xf32> to vector<2xf32>
      %154 = vector.shape_cast %153 : vector<2xf32> to vector<2x1xf32>
      %155 = tpu.iota {dimensions = array<i32: 1>} : vector<2x8xi32>
      %156 = vector.broadcast %154 : vector<2x1xf32> to vector<2x8xf32>
      %157 = arith.cmpf oeq, %144, %156 : vector<2x8xf32>
      %c8_i32 = arith.constant 8 : i32
      %158 = vector.broadcast %c8_i32 : i32 to vector<2x8xi32>
      %159 = arith.select %157, %155, %158 : vector<2x8xi1>, vector<2x8xi32>
      %cst_53 = arith.constant dense<2147483647> : vector<2xi32>
      %160 = vector.multi_reduction <minsi>, %159, %cst_53 [1] : vector<2x8xi32> to vector<2xi32>
      %161 = vector.shape_cast %160 : vector<2xi32> to vector<2x1xi32>
      scf.yield %161, %141, %139, %102 : vector<2x1xi32>, vector<2x16xf32>, vector<2x16xf32>, vector<2x16xf32>
    }
    %c16_i32_34 = arith.constant 16 : i32
    return
  }
}

</mosaic_0001>

<llo_original>
// kernel: tpu_custom_call.1
$region0: #{tpu_custom_call.1}
  #allocation0 [shape = 'u32[]', space=smem, size = 0x4, offset = 0x4, fixed_abs, tag = 'smem constant byte address 0x4 - core index']
  #allocation1 [shape = 'u32[144,128]{1,0:T(1,128)}', space=vmem, size = 0x12000, scoped, tag = 'internal scratch']
  #allocation2 [shape = 'f32[1,1]{1,0:T(1,128)S(1)}', space=vmem, size = 0x200, scoped, tag = 'scoped memory for tpu_custom_call.1']
  %s0 = inlined_call_operand.vmem [shape: f32[2,16,8], index: 0, kind: input, shape index: {}]
  %s1 = inlined_call_operand.vmem [shape: f32[2,16], index: 1, kind: input, shape index: {}]
  %s2 = inlined_call_operand.vmem [shape: f32[2,16], index: 2, kind: input, shape index: {}]
  %s3 = inlined_call_operand.vmem [shape: f32[8,64], index: 3, kind: input, shape index: {}]
  %s4 = inlined_call_operand.vmem [shape: f32[8,16], index: 4, kind: input, shape index: {}]
  %s5 = inlined_call_operand.vmem [shape: f32[16,80], index: 5, kind: input, shape index: {}]
  %s6 = inlined_call_operand.vmem [shape: f32[5,1,16], index: 6, kind: input, shape index: {}]
  %s7 = inlined_call_operand.vmem [shape: f32[1,16], index: 7, kind: input, shape index: {}]
  %s8 = inlined_call_operand.vmem [shape: f32[1,16], index: 8, kind: input, shape index: {}]
  %s9 = inlined_call_operand.<no memory space> [shape: f32[1,1], index: 9, kind: input, shape index: {}]
  %s10 = inlined_call_operand.vmem [shape: f32[8,64], index: 10, kind: input, shape index: {}]
  %s11 = inlined_call_operand.vmem [shape: f32[1,64], index: 11, kind: input, shape index: {}]
  %s12 = inlined_call_operand.vmem [shape: f32[16,8], index: 12, kind: input, shape index: {}]
  %s13 = inlined_call_operand.vmem [shape: f32[1,8], index: 13, kind: input, shape index: {}]
  %s14 = inlined_call_operand.vmem [shape: f32[16,2,8], index: 14, kind: output, shape index: {0}]
  %s15 = inlined_call_operand.hbm [shape: f32[16,2,16], index: 15, kind: output, shape index: {1}]
  %16 = xla_tuple %s14, %s15
  %s17 = sld [smem:[#allocation0]]
  $region81: #{tpu_custom_call.1} parent=0
    _
  %s19 = ssub.s32 1, %s17
  %s20 = scalar_select 0, %s19, %s17
  %v21 = vstv %s9
  %22 = vst [vmem:[#allocation2] sm:$0x1] %v21
  $region1: #{tpu_custom_call.1} parent=0
    #allocation3 [shape = 'u8[16384]{0}', space=vmem, size = 0x4000, scoped, tag = 'output window, operand 1, single buffered']
    #allocation4 [shape = 's32[1]{0}', space=sflag, size = 0x4, scoped, tag = 'scoped memory for tpu_custom_call.1']
    %23 = vsyncpa [#allocation4], 0
    // Predicated region
    $region2: #{tpu_custom_call.1} parent=1 // pred_check
      _
    $region3: #{tpu_custom_call.1} parent=1 // pred_check_branch
      %25 = sbr.rel (0) target = $region5
    $region4: #{tpu_custom_call.1} parent=1 // pred_region
      _
    $region5: #{tpu_custom_call.1} parent=1 // pred_fallthru
      _
    // Predicated region
    $region6: #{tpu_custom_call.1} parent=1 // pred_check
      _
    $region7: #{tpu_custom_call.1} parent=1 // pred_check_branch
      %27 = sbr.rel (0) target = $region9
    $region8: #{tpu_custom_call.1} parent=1 // pred_region
      _
    $region9: #{tpu_custom_call.1} parent=1 // pred_fallthru
      _
    // Predicated region
    $region10: #{tpu_custom_call.1} parent=1 // pred_check
      _
    $region11: #{tpu_custom_call.1} parent=1 // pred_check_branch
      %29 = sbr.rel (0) target = $region13
    $region12: #{tpu_custom_call.1} parent=1 // pred_region
      _
    $region13: #{tpu_custom_call.1} parent=1 // pred_fallthru
      _
    // Predicated region
    $region14: #{tpu_custom_call.1} parent=1 // pred_check
      _
    $region15: #{tpu_custom_call.1} parent=1 // pred_check_branch
      %31 = sbr.rel (0) target = $region17
    $region16: #{tpu_custom_call.1} parent=1 // pred_region
      _
    $region17: #{tpu_custom_call.1} parent=1 // pred_fallthru
      _
    // Predicated region
    $region18: #{tpu_custom_call.1} parent=1 // pred_check
      _
    $region19: #{tpu_custom_call.1} parent=1 // pred_check_branch
      %33 = sbr.rel (0) target = $region21
    $region20: #{tpu_custom_call.1} parent=1 // pred_region
      _
    $region21: #{tpu_custom_call.1} parent=1 // pred_fallthru
      _
    // Predicated region
    $region22: #{tpu_custom_call.1} parent=1 // pred_check
      _
    $region23: #{tpu_custom_call.1} parent=1 // pred_check_branch
      %35 = sbr.rel (0) target = $region25
    $region24: #{tpu_custom_call.1} parent=1 // pred_region
      _
    $region25: #{tpu_custom_call.1} parent=1 // pred_fallthru
      _
    // Predicated region
    $region26: #{tpu_custom_call.1} parent=1 // pred_check
      _
    $region27: #{tpu_custom_call.1} parent=1 // pred_check_branch
      %37 = sbr.rel (0) target = $region29
    $region28: #{tpu_custom_call.1} parent=1 // pred_region
      _
    $region29: #{tpu_custom_call.1} parent=1 // pred_fallthru
      _
    // Predicated region
    $region30: #{tpu_custom_call.1} parent=1 // pred_check
      _
    $region31: #{tpu_custom_call.1} parent=1 // pred_check_branch
      %39 = sbr.rel (0) target = $region33
    $region32: #{tpu_custom_call.1} parent=1 // pred_region
      _
    $region33: #{tpu_custom_call.1} parent=1 // pred_fallthru
      _
    // Predicated region
    $region34: #{tpu_custom_call.1} parent=1 // pred_check
      _
    $region35: #{tpu_custom_call.1} parent=1 // pred_check_branch
      %41 = sbr.rel (0) target = $region37
    $region36: #{tpu_custom_call.1} parent=1 // pred_region
      _
    $region37: #{tpu_custom_call.1} parent=1 // pred_fallthru
      _
    // Predicated region
    $region38: #{tpu_custom_call.1} parent=1 // pred_check
      _
    $region39: #{tpu_custom_call.1} parent=1 // pred_check_branch
      %43 = sbr.rel (0) target = $region41
    $region40: #{tpu_custom_call.1} parent=1 // pred_region
      _
    $region41: #{tpu_custom_call.1} parent=1 // pred_fallthru
      _
    // Predicated region
    $region42: #{tpu_custom_call.1} parent=1 // pred_check
      _
    $region43: #{tpu_custom_call.1} parent=1 // pred_check_branch
      %45 = sbr.rel (0) target = $region45
    $region44: #{tpu_custom_call.1} parent=1 // pred_region
      _
    $region45: #{tpu_custom_call.1} parent=1 // pred_fallthru
      _
    // Predicated region
    $region46: #{tpu_custom_call.1} parent=1 // pred_check
      _
    $region47: #{tpu_custom_call.1} parent=1 // pred_check_branch
      %47 = sbr.rel (0) target = $region49
    $region48: #{tpu_custom_call.1} parent=1 // pred_region
      _
    $region49: #{tpu_custom_call.1} parent=1 // pred_fallthru
      _
    // Predicated region
    $region50: #{tpu_custom_call.1} parent=1 // pred_check
      _
    $region51: #{tpu_custom_call.1} parent=1 // pred_check_branch
      %49 = sbr.rel (0) target = $region53
    $region52: #{tpu_custom_call.1} parent=1 // pred_region
      _
    $region53: #{tpu_custom_call.1} parent=1 // pred_fallthru
      _
    // Predicated region
    $region54: #{tpu_custom_call.1} parent=1 // pred_check
      _
    $region55: #{tpu_custom_call.1} parent=1 // pred_check_branch
      %51 = sbr.rel (0) target = $region57
    $region56: #{tpu_custom_call.1} parent=1 // pred_region
      _
    $region57: #{tpu_custom_call.1} parent=1 // pred_fallthru
      _
    %v52 = vld [vmem:[%s0] sm:$0xff]
    %v53 = vld [vmem:[%s0 + $0x8] sm:$0xff]
    %v54 = vld [vmem:[%s0 + $0x10] sm:$0xff]
    %v55 = vld [vmem:[%s0 + $0x18] sm:$0xff]
    %v56 = vld [vmem:[%s1] sm:$0x3]
    %v57 = vld [vmem:[%s2] sm:$0x3]
    %v58 = vld [vmem:[%s3] sm:$0xff]
    %v59 = vld [vmem:[%s4] sm:$0xff]
    %v60 = vld [vmem:[%s5] sm:$0xff]
    %v61 = vld [vmem:[%s5 + $0x8] sm:$0xff]
    %v62 = vld [vmem:[%s6] sm:$0x1]
    %v63 = vld [vmem:[%s6 + $0x1] sm:$0x1]
    %v64 = vld [vmem:[%s6 + $0x2] sm:$0x1]
    %v65 = vld [vmem:[%s6 + $0x3] sm:$0x1]
    %v66 = vld [vmem:[%s6 + $0x4] sm:$0x1]
    %v67 = vld [vmem:[%s7] sm:$0x1]
    %v68 = vld [vmem:[%s8] sm:$0x1]
    %v69 = vld [vmem:[#allocation2] sm:$0x1]
    %v70 = vld [vmem:[%s10] sm:$0xff]
    %v71 = vld [vmem:[%s11] sm:$0x1]
    %v72 = vld [vmem:[%s12] sm:$0xff]
    %v73 = vld [vmem:[%s12 + $0x8] sm:$0xff]
    %v74 = vld [vmem:[%s13] sm:$0x1]
    %vm75 = vcmask 64512
    %v77 = vsel %vm75, %v52, 0
    %v80 = vsel %vm75, %v53, 0
    %82 = vmatprep.subr.mxu0 0.0
    %83 = vmatpush1.msra.mxu0 0.0
    %84 = vmatprep.subr.mxu0 0.0
    %85 = vmatpush1.msra.mxu0 0.0
    %86 = vmatprep.subr.mxu0 0.0
    %87 = vmatpush1.msra.mxu0 0.0
    %88 = vmatprep.subr.mxu0 0.0
    %89 = vmatpush1.msra.mxu0 0.0
    %90 = vmatprep.subr.mxu0 0.0
    %91 = vmatpush1.msra.mxu0 0.0
    %92 = vmatprep.subr.mxu0 0.0
    %93 = vmatpush1.msra.mxu0 0.0
    %94 = vmatprep.subr.mxu0 0.0
    %95 = vmatpush1.msra.mxu0 0.0
    %96 = vmatprep.subr.mxu0 0.0
    %97 = vmatpush1.msra.mxu0 0.0
    %98 = vmatprep.subr.mxu0 0.0
    %99 = vmatpush1.msra.mxu0 0.0
    %100 = vmatprep.subr.mxu0 0.0
    %101 = vmatpush1.msra.mxu0 0.0
    %102 = vmatprep.subr.mxu0 0.0
    %103 = vmatpush1.msra.mxu0 0.0
    %104 = vmatprep.subr.mxu0 0.0
    %105 = vmatpush1.msra.mxu0 0.0
    %106 = vmatprep.subr.mxu0 0.0
    %107 = vmatpush1.msra.mxu0 0.0
    %108 = vmatprep.subr.mxu0 0.0
    %109 = vmatpush1.msra.mxu0 0.0
    %110 = vmatprep.subr.mxu0 0.0
    %111 = vmatpush1.msra.mxu0 0.0
    %112 = vmatprep.subr.mxu0 0.0
    %113 = vmatpush1.msra.mxu0 %v59
    %114 = vmatprep.subr.mxu0 0.0
    %115 = vmatpush2.msra.mxu0 0.0
    %116 = vmatprep.subr.mxu0 0.0
    %117 = vmatpush2.msra.mxu0 0.0
    %118 = vmatprep.subr.mxu0 0.0
    %119 = vmatpush2.msra.mxu0 0.0
    %120 = vmatprep.subr.mxu0 0.0
    %121 = vmatpush2.msra.mxu0 0.0
    %122 = vmatprep.subr.mxu0 0.0
    %123 = vmatpush2.msra.mxu0 0.0
    %124 = vmatprep.subr.mxu0 0.0
    %125 = vmatpush2.msra.mxu0 0.0
    %126 = vmatprep.subr.mxu0 0.0
    %127 = vmatpush2.msra.mxu0 0.0
    %128 = vmatprep.subr.mxu0 0.0
    %129 = vmatpush2.msra.mxu0 0.0
    %130 = vmatprep.subr.mxu0 0.0
    %131 = vmatpush2.msra.mxu0 0.0
    %132 = vmatprep.subr.mxu0 0.0
    %133 = vmatpush2.msra.mxu0 0.0
    %134 = vmatprep.subr.mxu0 0.0
    %135 = vmatpush2.msra.mxu0 0.0
    %136 = vmatprep.subr.mxu0 0.0
    %137 = vmatpush2.msra.mxu0 0.0
    %138 = vmatprep.subr.mxu0 0.0
    %139 = vmatpush2.msra.mxu0 0.0
    %140 = vmatprep.subr.mxu0 0.0
    %141 = vmatpush2.msra.mxu0 0.0
    %142 = vmatprep.subr.mxu0 0.0
    %143 = vmatpush2.msra.mxu0 0.0
    %144 = vmatprep.subr.mxu0 0.0
    %145 = vmatpush2.msra.mxu0 0.0
    %146 = vmatprep.mubr.f32.mxu0 0.0
    %147 = vmatmul.mubr.f32.gmra.mxu0 %v77
    %v148 = vpop.f32.mrf.mxu0
    %v149 = vadd.f32 0.0, %v148
    %v150 = vpop.f32.mrf.mxu0
    %151 = vmatprep.mubr.f32.mxu0 0.0
    %152 = vmatmul.mubr.f32.gmra.mxu0 %v80
    %v153 = vpop.f32.mrf.mxu0
    %v154 = vadd.f32 0.0, %v153
    %v155 = vpop.f32.mrf.mxu0
    %156 = vdwg.mxu0
    %v158 = vsel %vm75, %v54, 0
    %v161 = vsel %vm75, %v55, 0
    %163 = vmatprep.subr.mxu0 0.0
    %164 = vmatpush1.msra.mxu0 0.0
    %165 = vmatprep.subr.mxu0 0.0
    %166 = vmatpush1.msra.mxu0 0.0
    %167 = vmatprep.subr.mxu0 0.0
    %168 = vmatpush1.msra.mxu0 0.0
    %169 = vmatprep.subr.mxu0 0.0
    %170 = vmatpush1.msra.mxu0 0.0
    %171 = vmatprep.subr.mxu0 0.0
    %172 = vmatpush1.msra.mxu0 0.0
    %173 = vmatprep.subr.mxu0 0.0
    %174 = vmatpush1.msra.mxu0 0.0
    %175 = vmatprep.subr.mxu0 0.0
    %176 = vmatpush1.msra.mxu0 0.0
    %177 = vmatprep.subr.mxu0 0.0
    %178 = vmatpush1.msra.mxu0 0.0
    %179 = vmatprep.subr.mxu0 0.0
    %180 = vmatpush1.msra.mxu0 0.0
    %181 = vmatprep.subr.mxu0 0.0
    %182 = vmatpush1.msra.mxu0 0.0
    %183 = vmatprep.subr.mxu0 0.0
    %184 = vmatpush1.msra.mxu0 0.0
    %185 = vmatprep.subr.mxu0 0.0
    %186 = vmatpush1.msra.mxu0 0.0
    %187 = vmatprep.subr.mxu0 0.0
    %188 = vmatpush1.msra.mxu0 0.0
    %189 = vmatprep.subr.mxu0 0.0
    %190 = vmatpush1.msra.mxu0 0.0
    %191 = vmatprep.subr.mxu0 0.0
    %192 = vmatpush1.msra.mxu0 0.0
    %193 = vmatprep.subr.mxu0 0.0
    %194 = vmatpush1.msra.mxu0 %v59
    %195 = vmatprep.subr.mxu0 0.0
    %196 = vmatpush2.msra.mxu0 0.0
    %197 = vmatprep.subr.mxu0 0.0
    %198 = vmatpush2.msra.mxu0 0.0
    %199 = vmatprep.subr.mxu0 0.0
    %200 = vmatpush2.msra.mxu0 0.0
    %201 = vmatprep.subr.mxu0 0.0
    %202 = vmatpush2.msra.mxu0 0.0
    %203 = vmatprep.subr.mxu0 0.0
    %204 = vmatpush2.msra.mxu0 0.0
    %205 = vmatprep.subr.mxu0 0.0
    %206 = vmatpush2.msra.mxu0 0.0
    %207 = vmatprep.subr.mxu0 0.0
    %208 = vmatpush2.msra.mxu0 0.0
    %209 = vmatprep.subr.mxu0 0.0
    %210 = vmatpush2.msra.mxu0 0.0
    %211 = vmatprep.subr.mxu0 0.0
    %212 = vmatpush2.msra.mxu0 0.0
    %213 = vmatprep.subr.mxu0 0.0
    %214 = vmatpush2.msra.mxu0 0.0
    %215 = vmatprep.subr.mxu0 0.0
    %216 = vmatpush2.msra.mxu0 0.0
    %217 = vmatprep.subr.mxu0 0.0
    %218 = vmatpush2.msra.mxu0 0.0
    %219 = vmatprep.subr.mxu0 0.0
    %220 = vmatpush2.msra.mxu0 0.0
    %221 = vmatprep.subr.mxu0 0.0
    %222 = vmatpush2.msra.mxu0 0.0
    %223 = vmatprep.subr.mxu0 0.0
    %224 = vmatpush2.msra.mxu0 0.0
    %225 = vmatprep.subr.mxu0 0.0
    %226 = vmatpush2.msra.mxu0 0.0
    %227 = vmatprep.mubr.f32.mxu0 0.0
    %228 = vmatmul.mubr.f32.gmra.mxu0 %v158
    %v229 = vpop.f32.mrf.mxu0
    %v230 = vadd.f32 0.0, %v229
    %v231 = vpop.f32.mrf.mxu0
    %232 = vmatprep.mubr.f32.mxu0 0.0
    %233 = vmatmul.mubr.f32.gmra.mxu0 %v161
    %v234 = vpop.f32.mrf.mxu0
    %v235 = vadd.f32 0.0, %v234
    %v236 = vpop.f32.mrf.mxu0
    %237 = vdwg.mxu0
    loop: start=0, step=1, limit=16
    $region58: #{tpu_custom_call.1} parent=1 // loop_pre_header
      _
    $region59: #{tpu_custom_call.1} parent=1 // loop_header
      %s239 = sphi 0, %s243
      %p240 = scmp.ge.s32.totalorder %s239, 16
      %v244 = vphi 1, %v1204
      %v245 = vphi 0.0, %v1095
      %v246 = vphi 0.0, %v1089
      %v247 = vphi %v57, %v1181
    $region60: #{tpu_custom_call.1} parent=1 // loop_header_branch
      %242 = sbr.rel (%p240) target = $region64
    $region61: #{tpu_custom_call.1} parent=1 // loop_body
      %249 = vrot.lane.b32.xlu0 %v245, 80
      %v250 = vpop.permute.xlu0 %249
      %vm251 = vcmask 130048
      %v252 = vsel %vm251, %v250, 0
      %254 = vmatprep.subr.mxu0 0.0
      %255 = vmatpush1.msra.mxu0 0.0
      %256 = vmatprep.subr.mxu0 0.0
      %257 = vmatpush1.msra.mxu0 0.0
      %258 = vmatprep.subr.mxu0 0.0
      %259 = vmatpush1.msra.mxu0 0.0
      %260 = vmatprep.subr.mxu0 0.0
      %261 = vmatpush1.msra.mxu0 0.0
      %262 = vmatprep.subr.mxu0 0.0
      %263 = vmatpush1.msra.mxu0 0.0
      %264 = vmatprep.subr.mxu0 0.0
      %265 = vmatpush1.msra.mxu0 0.0
      %266 = vmatprep.subr.mxu0 0.0
      %267 = vmatpush1.msra.mxu0 0.0
      %268 = vmatprep.subr.mxu0 0.0
      %269 = vmatpush1.msra.mxu0 0.0
      %270 = vmatprep.subr.mxu0 0.0
      %271 = vmatpush1.msra.mxu0 0.0
      %272 = vmatprep.subr.mxu0 0.0
      %273 = vmatpush1.msra.mxu0 0.0
      %274 = vmatprep.subr.mxu0 0.0
      %275 = vmatpush1.msra.mxu0 0.0
      %276 = vmatprep.subr.mxu0 0.0
      %277 = vmatpush1.msra.mxu0 0.0
      %278 = vmatprep.subr.mxu0 0.0
      %279 = vmatpush1.msra.mxu0 0.0
      %280 = vmatprep.subr.mxu0 0.0
      %281 = vmatpush1.msra.mxu0 0.0
      %282 = vmatprep.subr.mxu0 0.0
      %283 = vmatpush1.msra.mxu0 %v61
      %284 = vmatprep.subr.mxu0 0.0
      %285 = vmatpush1.msra.mxu0 %v60
      %286 = vmatprep.subr.mxu0 0.0
      %287 = vmatpush2.msra.mxu0 0.0
      %288 = vmatprep.subr.mxu0 0.0
      %289 = vmatpush2.msra.mxu0 0.0
      %290 = vmatprep.subr.mxu0 0.0
      %291 = vmatpush2.msra.mxu0 0.0
      %292 = vmatprep.subr.mxu0 0.0
      %293 = vmatpush2.msra.mxu0 0.0
      %294 = vmatprep.subr.mxu0 0.0
      %295 = vmatpush2.msra.mxu0 0.0
      %296 = vmatprep.subr.mxu0 0.0
      %297 = vmatpush2.msra.mxu0 0.0
      %298 = vmatprep.subr.mxu0 0.0
      %299 = vmatpush2.msra.mxu0 0.0
      %300 = vmatprep.subr.mxu0 0.0
      %301 = vmatpush2.msra.mxu0 0.0
      %302 = vmatprep.subr.mxu0 0.0
      %303 = vmatpush2.msra.mxu0 0.0
      %304 = vmatprep.subr.mxu0 0.0
      %305 = vmatpush2.msra.mxu0 0.0
      %306 = vmatprep.subr.mxu0 0.0
      %307 = vmatpush2.msra.mxu0 0.0
      %308 = vmatprep.subr.mxu0 0.0
      %309 = vmatpush2.msra.mxu0 0.0
      %310 = vmatprep.subr.mxu0 0.0
      %311 = vmatpush2.msra.mxu0 0.0
      %312 = vmatprep.subr.mxu0 0.0
      %313 = vmatpush2.msra.mxu0 0.0
      %314 = vmatprep.subr.mxu0 0.0
      %315 = vmatpush2.msra.mxu0 0.0
      %316 = vmatprep.subr.mxu0 0.0
      %317 = vmatpush2.msra.mxu0 0.0
      %318 = vmatprep.mubr.f32.mxu0 0.0
      %319 = vmatmul.mubr.f32.gmra.mxu0 %v252
      %v320 = vpop.f32.mrf.mxu0
      %v321 = vadd.f32 0.0, %v320
      %v322 = vpop.f32.mrf.mxu0
      %323 = vdwg.mxu0
      %325 = vrot.lane.b32.xlu0 %v247, 2
      %v326 = vpop.permute.xlu0 %325
      %vm328 = vcmask 15360
      %v329 = vsel %vm328, 0.0, %v326
      %vm330 = vcmask 146432
      %v331 = vsel %vm330, %v329, 0.0
      %v332 = vlaneseq
      %v333 = vshrl.u32 %v332, 7
      %v334 = vsub.s32 0, %v333
      %v335 = vrot.slane %v331, %v334
      %337 = vbcast.lane.b32.xlu0 %v335, 256
      %v338 = vpop.permute.xlu0 %337
      %s340 = sor.u32 256, 8
      %341 = vbcast.lane.b32.xlu0 %v335, %s340
      %v342 = vpop.permute.xlu0 %341
      %v343 = vlaneseq
      %v344 = vshrl.u32 %v343, 7
      %v345 = vsub.s32 1, %v344
      %v346 = vrot.slane %v331, %v345
      %348 = vbcast.lane.b32.xlu0 %v346, 256
      %v349 = vpop.permute.xlu0 %348
      %s351 = sor.u32 256, 8
      %352 = vbcast.lane.b32.xlu0 %v346, %s351
      %v353 = vpop.permute.xlu0 %352
      %v355 = vlaneseq
      %v356 = vshrl.u32 %v355, 7
      %v357 = vsub.s32 0, %v356
      %v358 = vrot.slane %v62, %v357
      %v360 = vmul.f32 %v338, %v358
      %v361 = vmul.f32 %v342, %v358
      %v362 = vmul.f32 %v349, %v358
      %v363 = vmul.f32 %v353, %v358
      %s365 = sor.u32 256, 1
      %366 = vbcast.lane.b32.xlu0 %v335, %s365
      %v367 = vpop.permute.xlu0 %366
      %s369 = sor.u32 256, 9
      %370 = vbcast.lane.b32.xlu0 %v335, %s369
      %v371 = vpop.permute.xlu0 %370
      %s373 = sor.u32 256, 1
      %374 = vbcast.lane.b32.xlu0 %v346, %s373
      %v375 = vpop.permute.xlu0 %374
      %s377 = sor.u32 256, 9
      %378 = vbcast.lane.b32.xlu0 %v346, %s377
      %v379 = vpop.permute.xlu0 %378
      %v381 = vlaneseq
      %v382 = vshrl.u32 %v381, 7
      %v383 = vsub.s32 0, %v382
      %v384 = vrot.slane %v63, %v383
      %v386 = vmul.f32 %v367, %v384
      %v387 = vmul.f32 %v371, %v384
      %v388 = vmul.f32 %v375, %v384
      %v389 = vmul.f32 %v379, %v384
      %v390 = vadd.f32 %v360, %v386
      %v391 = vadd.f32 %v361, %v387
      %v392 = vadd.f32 %v362, %v388
      %v393 = vadd.f32 %v363, %v389
      %s395 = sor.u32 256, 2
      %396 = vbcast.lane.b32.xlu0 %v335, %s395
      %v397 = vpop.permute.xlu0 %396
      %s399 = sor.u32 256, 10
      %400 = vbcast.lane.b32.xlu0 %v335, %s399
      %v401 = vpop.permute.xlu0 %400
      %s403 = sor.u32 256, 2
      %404 = vbcast.lane.b32.xlu0 %v346, %s403
      %v405 = vpop.permute.xlu0 %404
      %s407 = sor.u32 256, 10
      %408 = vbcast.lane.b32.xlu0 %v346, %s407
      %v409 = vpop.permute.xlu0 %408
      %v411 = vlaneseq
      %v412 = vshrl.u32 %v411, 7
      %v413 = vsub.s32 0, %v412
      %v414 = vrot.slane %v64, %v413
      %v416 = vmul.f32 %v397, %v414
      %v417 = vmul.f32 %v401, %v414
      %v418 = vmul.f32 %v405, %v414
      %v419 = vmul.f32 %v409, %v414
      %v420 = vadd.f32 %v390, %v416
      %v421 = vadd.f32 %v391, %v417
      %v422 = vadd.f32 %v392, %v418
      %v423 = vadd.f32 %v393, %v419
      %s425 = sor.u32 256, 3
      %426 = vbcast.lane.b32.xlu0 %v335, %s425
      %v427 = vpop.permute.xlu0 %426
      %s429 = sor.u32 256, 11
      %430 = vbcast.lane.b32.xlu0 %v335, %s429
      %v431 = vpop.permute.xlu0 %430
      %s433 = sor.u32 256, 3
      %434 = vbcast.lane.b32.xlu0 %v346, %s433
      %v435 = vpop.permute.xlu0 %434
      %s437 = sor.u32 256, 11
      %438 = vbcast.lane.b32.xlu0 %v346, %s437
      %v439 = vpop.permute.xlu0 %438
      %v441 = vlaneseq
      %v442 = vshrl.u32 %v441, 7
      %v443 = vsub.s32 0, %v442
      %v444 = vrot.slane %v65, %v443
      %v446 = vmul.f32 %v427, %v444
      %v447 = vmul.f32 %v431, %v444
      %v448 = vmul.f32 %v435, %v444
      %v449 = vmul.f32 %v439, %v444
      %v450 = vadd.f32 %v420, %v446
      %v451 = vadd.f32 %v421, %v447
      %v452 = vadd.f32 %v422, %v448
      %v453 = vadd.f32 %v423, %v449
      %s455 = sor.u32 256, 4
      %456 = vbcast.lane.b32.xlu0 %v335, %s455
      %v457 = vpop.permute.xlu0 %456
      %s459 = sor.u32 256, 12
      %460 = vbcast.lane.b32.xlu0 %v335, %s459
      %v461 = vpop.permute.xlu0 %460
      %s463 = sor.u32 256, 4
      %464 = vbcast.lane.b32.xlu0 %v346, %s463
      %v465 = vpop.permute.xlu0 %464
      %s467 = sor.u32 256, 12
      %468 = vbcast.lane.b32.xlu0 %v346, %s467
      %v469 = vpop.permute.xlu0 %468
      %v471 = vlaneseq
      %v472 = vshrl.u32 %v471, 7
      %v473 = vsub.s32 0, %v472
      %v474 = vrot.slane %v66, %v473
      %v476 = vmul.f32 %v457, %v474
      %v477 = vmul.f32 %v461, %v474
      %v478 = vmul.f32 %v465, %v474
      %v479 = vmul.f32 %v469, %v474
      %v480 = vadd.f32 %v450, %v476
      %v481 = vadd.f32 %v451, %v477
      %v482 = vadd.f32 %v452, %v478
      %v483 = vadd.f32 %v453, %v479
      %v486 = vunpack.c.l.s4 1966171168
      %v487 = vunpack.c.0.s8 %v486
      %v488 = vlaneseq
      %v489 = vshrl.u32 %v488, 7
      %v490 = vsub.s32 %v487, %v489
      %v491 = vrot.slane %v321, %v490
      %v492 = vcombine.high %v491, %v491
      %v494 = vunpack.c.l.s4 1966171168
      %v495 = vunpack.c.0.s8 %v494
      %v496 = vlaneseq
      %v497 = vshrl.u32 %v496, 7
      %v498 = vsub.s32 %v495, %v497
      %v499 = vrot.slane %v491, %v498
      %v501 = vunpack.c.l.s4 1966171168
      %v502 = vunpack.c.0.s8 %v501
      %v503 = vlaneseq
      %v504 = vshrl.u32 %v503, 7
      %v505 = vsub.s32 %v502, %v504
      %v506 = vrot.slane %v492, %v505
      %v507 = vlaneseq
      %v508 = vshrl.u32 %v507, 7
      %v509 = vsub.s32 0, %v508
      %v510 = vrot.slane %v499, %v509
      %v511 = vlaneseq
      %v512 = vshrl.u32 %v511, 7
      %v513 = vsub.s32 0, %v512
      %v514 = vrot.slane %v506, %v513
      %v517 = vadd.f32 %v510, %v149
      %v518 = vadd.f32 %v510, %v154
      %v519 = vadd.f32 %v514, %v230
      %v520 = vadd.f32 %v514, %v235
      %v521 = vadd.f32 %v517, %v480
      %v522 = vadd.f32 %v518, %v481
      %v523 = vadd.f32 %v519, %v482
      %v524 = vadd.f32 %v520, %v483
      %v526 = vlaneseq
      %v527 = vshrl.u32 %v526, 7
      %v528 = vsub.s32 0, %v527
      %v529 = vrot.slane %v67, %v528
      %v531 = vadd.f32 %v521, %v529
      %v532 = vadd.f32 %v522, %v529
      %v533 = vadd.f32 %v523, %v529
      %v534 = vadd.f32 %v524, %v529
      %v535 = vtanh.pop %v531
      %v536 = vtanh.pop %v532
      %v537 = vtanh.pop %v533
      %v538 = vtanh.pop %v534
      %v540 = vlaneseq
      %v541 = vshrl.u32 %v540, 7
      %v542 = vsub.s32 0, %v541
      %v543 = vrot.slane %v68, %v542
      %v545 = vmul.f32 %v535, %v543
      %v546 = vmul.f32 %v536, %v543
      %v547 = vmul.f32 %v537, %v543
      %v548 = vmul.f32 %v538, %v543
      %v549 = vsel %vm251, %v545, 0.0
      %550 = vadd.xlane.f32.xlu0 %v549
      %v551 = vpop.xlane.xlu0 %550
      %v552 = vsel %vm251, %v546, 0.0
      %553 = vadd.xlane.f32.xlu0 %v552
      %v554 = vpop.xlane.xlu0 %553
      %v555 = vsel %vm251, %v547, 0.0
      %556 = vadd.xlane.f32.xlu0 %v555
      %v557 = vpop.xlane.xlu0 %556
      %v558 = vsel %vm251, %v548, 0.0
      %559 = vadd.xlane.f32.xlu0 %v558
      %v560 = vpop.xlane.xlu0 %559
      %v562 = vlaneseq
      %v563 = vshrl.u32 %v562, 7
      %v564 = vsub.s32 0, %v563
      %v565 = vrot.slane %v69, %v564
      %566 = vset.pattern.permute.xlu0 0
      %567 = vperm.xlu0 %566, %v565
      %v568 = vpop.permute.xlu0 %567
      %v570 = vadd.f32 %v551, %v568
      %v571 = vadd.f32 %v554, %v568
      %v572 = vadd.f32 %v557, %v568
      %v573 = vadd.f32 %v560, %v568
      %v575 = vlaneseq
      %v576 = vshrl.u32 %v575, 7
      %v577 = vsub.s32 0, %v576
      %v578 = vrot.slane %v56, %v577
      %580 = vbcast.lane.b32.xlu0 %v578, 256
      %v581 = vpop.permute.xlu0 %580
      %s583 = sor.u32 256, 8
      %584 = vbcast.lane.b32.xlu0 %v578, %s583
      %v585 = vpop.permute.xlu0 %584
      %v586 = vlaneseq
      %v587 = vshrl.u32 %v586, 7
      %v588 = vsub.s32 1, %v587
      %v589 = vrot.slane %v56, %v588
      %591 = vbcast.lane.b32.xlu0 %v589, 256
      %v592 = vpop.permute.xlu0 %591
      %s594 = sor.u32 256, 8
      %595 = vbcast.lane.b32.xlu0 %v589, %s594
      %v596 = vpop.permute.xlu0 %595
      %v601 = vadd.f32 %v570, %v581
      %v602 = vadd.f32 %v571, %v585
      %v603 = vadd.f32 %v572, %v592
      %v604 = vadd.f32 %v573, %v596
      %609 = vset.pattern.permute.xlu0 0
      %610 = vperm.xlu0 %609, %v601
      %v611 = vpop.permute.xlu0 %610
      %612 = vset.pattern.permute.xlu0 0
      %613 = vperm.xlu0 %612, %v602
      %v614 = vpop.permute.xlu0 %613
      %615 = vset.pattern.permute.xlu0 0
      %616 = vperm.xlu0 %615, %v603
      %v617 = vpop.permute.xlu0 %616
      %618 = vset.pattern.permute.xlu0 0
      %619 = vperm.xlu0 %618, %v604
      %v620 = vpop.permute.xlu0 %619
      %v621 = vlaneseq
      %v622 = vand.u32 %v621, 127
      %v623 = vlaneseq
      %v624 = vshrl.u32 %v623, 7
      %v625 = vsub.s32 %v622, %v624
      %v626 = vrot.slane %v611, %v625
      %v627 = vadd.s32 %v622, 4294967288
      %v628 = vlaneseq
      %v629 = vshrl.u32 %v628, 7
      %v630 = vsub.s32 %v627, %v629
      %v631 = vrot.slane %v614, %v630
      %vm632 = vcmask 130112
      %v633 = vsel %vm632, %v631, %v626
      %v634 = vlaneseq
      %v635 = vshrl.u32 %v634, 7
      %v636 = vsub.s32 %v622, %v635
      %v637 = vrot.slane %v617, %v636
      %v638 = vlaneseq
      %v639 = vshrl.u32 %v638, 7
      %v640 = vsub.s32 %v627, %v639
      %v641 = vrot.slane %v620, %v640
      %v642 = vsel %vm632, %v641, %v637
      %vm643 = vcmask 1041409
      %v644 = vsel %vm643, %v642, %v633
      %vm646 = vcmask 123904
      %v647 = vsel %vm646, %v644, -inf
      %648 = vmax.xlane.f32.xlu0 %v647
      %v649 = vpop.xlane.xlu0 %648
      %v651 = vlaneseq
      %v652 = vshrl.u32 %v651, 7
      %v653 = vsub.s32 0, %v652
      %v654 = vrot.slane %v649, %v653
      %v655 = vlaneseq
      %v656 = vshrl.u32 %v655, 7
      %v657 = vsub.s32 1, %v656
      %v658 = vrot.slane %v649, %v657
      %v661 = vsub.f32 %v601, %v654
      %v662 = vsub.f32 %v602, %v654
      %v663 = vsub.f32 %v603, %v658
      %v664 = vsub.f32 %v604, %v658
      %v665 = vmul.f32 %v661, 1.442695
      %v666 = vpow.pop %v665
      %v667 = vmul.f32 %v662, 1.442695
      %v668 = vpow.pop %v667
      %v669 = vmul.f32 %v663, 1.442695
      %v670 = vpow.pop %v669
      %v671 = vmul.f32 %v664, 1.442695
      %v672 = vpow.pop %v671
      %677 = vset.pattern.permute.xlu0 0
      %678 = vperm.xlu0 %677, %v666
      %v679 = vpop.permute.xlu0 %678
      %680 = vset.pattern.permute.xlu0 0
      %681 = vperm.xlu0 %680, %v668
      %v682 = vpop.permute.xlu0 %681
      %683 = vset.pattern.permute.xlu0 0
      %684 = vperm.xlu0 %683, %v670
      %v685 = vpop.permute.xlu0 %684
      %686 = vset.pattern.permute.xlu0 0
      %687 = vperm.xlu0 %686, %v672
      %v688 = vpop.permute.xlu0 %687
      %v689 = vlaneseq
      %v690 = vshrl.u32 %v689, 7
      %v691 = vsub.s32 %v622, %v690
      %v692 = vrot.slane %v679, %v691
      %v693 = vlaneseq
      %v694 = vshrl.u32 %v693, 7
      %v695 = vsub.s32 %v627, %v694
      %v696 = vrot.slane %v682, %v695
      %v697 = vsel %vm632, %v696, %v692
      %v698 = vlaneseq
      %v699 = vshrl.u32 %v698, 7
      %v700 = vsub.s32 %v622, %v699
      %v701 = vrot.slane %v685, %v700
      %v702 = vlaneseq
      %v703 = vshrl.u32 %v702, 7
      %v704 = vsub.s32 %v627, %v703
      %v705 = vrot.slane %v688, %v704
      %v706 = vsel %vm632, %v705, %v701
      %v707 = vsel %vm643, %v706, %v697
      %v709 = vsel %vm646, %v707, 0.0
      %710 = vadd.xlane.f32.xlu0 %v709
      %v711 = vpop.xlane.xlu0 %710
      %v713 = vlaneseq
      %v714 = vshrl.u32 %v713, 7
      %v715 = vsub.s32 0, %v714
      %v716 = vrot.slane %v711, %v715
      %v717 = vlaneseq
      %v718 = vshrl.u32 %v717, 7
      %v719 = vsub.s32 1, %v718
      %v720 = vrot.slane %v711, %v719
      %v723 = vrcp.pop %v716
      %v724 = vmul.f32 %v666, %v723
      %v725 = vmul.f32 %v668, %v723
      %v726 = vrcp.pop %v720
      %v727 = vmul.f32 %v670, %v726
      %v728 = vmul.f32 %v672, %v726
      %731 = vset.pattern.permute.xlu0 0
      %732 = vperm.xlu0 %731, %v724
      %v733 = vpop.permute.xlu0 %732
      %734 = vset.pattern.permute.xlu0 0
      %735 = vperm.xlu0 %734, %v725
      %v736 = vpop.permute.xlu0 %735
      %v737 = vlaneseq
      %v738 = vshrl.u32 %v737, 7
      %v739 = vsub.s32 %v622, %v738
      %v740 = vrot.slane %v733, %v739
      %v741 = vlaneseq
      %v742 = vshrl.u32 %v741, 7
      %v743 = vsub.s32 %v627, %v742
      %v744 = vrot.slane %v736, %v743
      %v745 = vsel %vm632, %v744, %v740
      %v746 = vsel %vm251, %v745, 0
      %748 = vmatprep.subr.mxu0 0.0
      %749 = vmatpush1.msra.mxu0 0.0
      %750 = vmatprep.subr.mxu0 0.0
      %751 = vmatpush1.msra.mxu0 0.0
      %752 = vmatprep.subr.mxu0 0.0
      %753 = vmatpush1.msra.mxu0 0.0
      %754 = vmatprep.subr.mxu0 0.0
      %755 = vmatpush1.msra.mxu0 0.0
      %756 = vmatprep.subr.mxu0 0.0
      %757 = vmatpush1.msra.mxu0 0.0
      %758 = vmatprep.subr.mxu0 0.0
      %759 = vmatpush1.msra.mxu0 0.0
      %760 = vmatprep.subr.mxu0 0.0
      %761 = vmatpush1.msra.mxu0 0.0
      %762 = vmatprep.subr.mxu0 0.0
      %763 = vmatpush1.msra.mxu0 0.0
      %764 = vmatprep.subr.mxu0 0.0
      %765 = vmatpush1.msra.mxu0 0.0
      %766 = vmatprep.subr.mxu0 0.0
      %767 = vmatpush1.msra.mxu0 0.0
      %768 = vmatprep.subr.mxu0 0.0
      %769 = vmatpush1.msra.mxu0 0.0
      %770 = vmatprep.subr.mxu0 0.0
      %771 = vmatpush1.msra.mxu0 0.0
      %772 = vmatprep.subr.mxu0 0.0
      %773 = vmatpush1.msra.mxu0 0.0
      %774 = vmatprep.subr.mxu0 0.0
      %775 = vmatpush1.msra.mxu0 0.0
      %776 = vmatprep.subr.mxu0 0.0
      %777 = vmatpush1.msra.mxu0 %v53
      %778 = vmatprep.subr.mxu0 0.0
      %779 = vmatpush1.msra.mxu0 %v52
      %780 = vmatprep.subr.mxu0 0.0
      %781 = vmatpush2.msra.mxu0 0.0
      %782 = vmatprep.subr.mxu0 0.0
      %783 = vmatpush2.msra.mxu0 0.0
      %784 = vmatprep.subr.mxu0 0.0
      %785 = vmatpush2.msra.mxu0 0.0
      %786 = vmatprep.subr.mxu0 0.0
      %787 = vmatpush2.msra.mxu0 0.0
      %788 = vmatprep.subr.mxu0 0.0
      %789 = vmatpush2.msra.mxu0 0.0
      %790 = vmatprep.subr.mxu0 0.0
      %791 = vmatpush2.msra.mxu0 0.0
      %792 = vmatprep.subr.mxu0 0.0
      %793 = vmatpush2.msra.mxu0 0.0
      %794 = vmatprep.subr.mxu0 0.0
      %795 = vmatpush2.msra.mxu0 0.0
      %796 = vmatprep.subr.mxu0 0.0
      %797 = vmatpush2.msra.mxu0 0.0
      %798 = vmatprep.subr.mxu0 0.0
      %799 = vmatpush2.msra.mxu0 0.0
      %800 = vmatprep.subr.mxu0 0.0
      %801 = vmatpush2.msra.mxu0 0.0
      %802 = vmatprep.subr.mxu0 0.0
      %803 = vmatpush2.msra.mxu0 0.0
      %804 = vmatprep.subr.mxu0 0.0
      %805 = vmatpush2.msra.mxu0 0.0
      %806 = vmatprep.subr.mxu0 0.0
      %807 = vmatpush2.msra.mxu0 0.0
      %808 = vmatprep.subr.mxu0 0.0
      %809 = vmatpush2.msra.mxu0 0.0
      %810 = vmatprep.subr.mxu0 0.0
      %811 = vmatpush2.msra.mxu0 0.0
      %812 = vmatprep.mubr.f32.mxu0 0.0
      %813 = vmatmul.mubr.f32.gmra.mxu0 %v746
      %v814 = vpop.f32.mrf.mxu0
      %v815 = vadd.f32 0.0, %v814
      %v816 = vpop.f32.mrf.mxu0
      %817 = vdwg.mxu0
      %820 = vset.pattern.permute.xlu0 0
      %821 = vperm.xlu0 %820, %v727
      %v822 = vpop.permute.xlu0 %821
      %823 = vset.pattern.permute.xlu0 0
      %824 = vperm.xlu0 %823, %v728
      %v825 = vpop.permute.xlu0 %824
      %v826 = vlaneseq
      %v827 = vshrl.u32 %v826, 7
      %v828 = vsub.s32 %v622, %v827
      %v829 = vrot.slane %v822, %v828
      %v830 = vlaneseq
      %v831 = vshrl.u32 %v830, 7
      %v832 = vsub.s32 %v627, %v831
      %v833 = vrot.slane %v825, %v832
      %v834 = vsel %vm632, %v833, %v829
      %v835 = vsel %vm251, %v834, 0
      %837 = vmatprep.subr.mxu0 0.0
      %838 = vmatpush1.msra.mxu0 0.0
      %839 = vmatprep.subr.mxu0 0.0
      %840 = vmatpush1.msra.mxu0 0.0
      %841 = vmatprep.subr.mxu0 0.0
      %842 = vmatpush1.msra.mxu0 0.0
      %843 = vmatprep.subr.mxu0 0.0
      %844 = vmatpush1.msra.mxu0 0.0
      %845 = vmatprep.subr.mxu0 0.0
      %846 = vmatpush1.msra.mxu0 0.0
      %847 = vmatprep.subr.mxu0 0.0
      %848 = vmatpush1.msra.mxu0 0.0
      %849 = vmatprep.subr.mxu0 0.0
      %850 = vmatpush1.msra.mxu0 0.0
      %851 = vmatprep.subr.mxu0 0.0
      %852 = vmatpush1.msra.mxu0 0.0
      %853 = vmatprep.subr.mxu0 0.0
      %854 = vmatpush1.msra.mxu0 0.0
      %855 = vmatprep.subr.mxu0 0.0
      %856 = vmatpush1.msra.mxu0 0.0
      %857 = vmatprep.subr.mxu0 0.0
      %858 = vmatpush1.msra.mxu0 0.0
      %859 = vmatprep.subr.mxu0 0.0
      %860 = vmatpush1.msra.mxu0 0.0
      %861 = vmatprep.subr.mxu0 0.0
      %862 = vmatpush1.msra.mxu0 0.0
      %863 = vmatprep.subr.mxu0 0.0
      %864 = vmatpush1.msra.mxu0 0.0
      %865 = vmatprep.subr.mxu0 0.0
      %866 = vmatpush1.msra.mxu0 %v55
      %867 = vmatprep.subr.mxu0 0.0
      %868 = vmatpush1.msra.mxu0 %v54
      %869 = vmatprep.subr.mxu0 0.0
      %870 = vmatpush2.msra.mxu0 0.0
      %871 = vmatprep.subr.mxu0 0.0
      %872 = vmatpush2.msra.mxu0 0.0
      %873 = vmatprep.subr.mxu0 0.0
      %874 = vmatpush2.msra.mxu0 0.0
      %875 = vmatprep.subr.mxu0 0.0
      %876 = vmatpush2.msra.mxu0 0.0
      %877 = vmatprep.subr.mxu0 0.0
      %878 = vmatpush2.msra.mxu0 0.0
      %879 = vmatprep.subr.mxu0 0.0
      %880 = vmatpush2.msra.mxu0 0.0
      %881 = vmatprep.subr.mxu0 0.0
      %882 = vmatpush2.msra.mxu0 0.0
      %883 = vmatprep.subr.mxu0 0.0
      %884 = vmatpush2.msra.mxu0 0.0
      %885 = vmatprep.subr.mxu0 0.0
      %886 = vmatpush2.msra.mxu0 0.0
      %887 = vmatprep.subr.mxu0 0.0
      %888 = vmatpush2.msra.mxu0 0.0
      %889 = vmatprep.subr.mxu0 0.0
      %890 = vmatpush2.msra.mxu0 0.0
      %891 = vmatprep.subr.mxu0 0.0
      %892 = vmatpush2.msra.mxu0 0.0
      %893 = vmatprep.subr.mxu0 0.0
      %894 = vmatpush2.msra.mxu0 0.0
      %895 = vmatprep.subr.mxu0 0.0
      %896 = vmatpush2.msra.mxu0 0.0
      %897 = vmatprep.subr.mxu0 0.0
      %898 = vmatpush2.msra.mxu0 0.0
      %899 = vmatprep.subr.mxu0 0.0
      %900 = vmatpush2.msra.mxu0 0.0
      %901 = vmatprep.mubr.f32.mxu0 0.0
      %902 = vmatmul.mubr.f32.gmra.mxu0 %v835
      %v903 = vpop.f32.mrf.mxu0
      %v904 = vadd.f32 0.0, %v903
      %v905 = vpop.f32.mrf.mxu0
      %906 = vdwg.mxu0
      %v907 = vadd.f32 %v815, 0.0
      %v908 = vadd.f32 %v904, 0.0
      %vm909 = vcmp.eq.s32.totalorder %v622, %v244
      %v910 = vsel %vm909, 1, 0
      %v911 = vcvt.s32.f32 %v910
      %v914 = vrot.slane %v908, 7
      %v915 = vsel %vm643, %v914, %v907
      %v916 = vsel %vm75, %v915, 0
      %918 = vmatprep.subr.mxu0 0.0
      %919 = vmatpush1.msra.mxu0 0.0
      %920 = vmatprep.subr.mxu0 0.0
      %921 = vmatpush1.msra.mxu0 0.0
      %922 = vmatprep.subr.mxu0 0.0
      %923 = vmatpush1.msra.mxu0 0.0
      %924 = vmatprep.subr.mxu0 0.0
      %925 = vmatpush1.msra.mxu0 0.0
      %926 = vmatprep.subr.mxu0 0.0
      %927 = vmatpush1.msra.mxu0 0.0
      %928 = vmatprep.subr.mxu0 0.0
      %929 = vmatpush1.msra.mxu0 0.0
      %930 = vmatprep.subr.mxu0 0.0
      %931 = vmatpush1.msra.mxu0 0.0
      %932 = vmatprep.subr.mxu0 0.0
      %933 = vmatpush1.msra.mxu0 0.0
      %934 = vmatprep.subr.mxu0 0.0
      %935 = vmatpush1.msra.mxu0 0.0
      %936 = vmatprep.subr.mxu0 0.0
      %937 = vmatpush1.msra.mxu0 0.0
      %938 = vmatprep.subr.mxu0 0.0
      %939 = vmatpush1.msra.mxu0 0.0
      %940 = vmatprep.subr.mxu0 0.0
      %941 = vmatpush1.msra.mxu0 0.0
      %942 = vmatprep.subr.mxu0 0.0
      %943 = vmatpush1.msra.mxu0 0.0
      %944 = vmatprep.subr.mxu0 0.0
      %945 = vmatpush1.msra.mxu0 0.0
      %946 = vmatprep.subr.mxu0 0.0
      %947 = vmatpush1.msra.mxu0 0.0
      %948 = vmatprep.subr.mxu0 0.0
      %949 = vmatpush1.msra.mxu0 %v70
      %950 = vmatprep.subr.mxu0 0.0
      %951 = vmatpush2.msra.mxu0 0.0
      %952 = vmatprep.subr.mxu0 0.0
      %953 = vmatpush2.msra.mxu0 0.0
      %954 = vmatprep.subr.mxu0 0.0
      %955 = vmatpush2.msra.mxu0 0.0
      %956 = vmatprep.subr.mxu0 0.0
      %957 = vmatpush2.msra.mxu0 0.0
      %958 = vmatprep.subr.mxu0 0.0
      %959 = vmatpush2.msra.mxu0 0.0
      %960 = vmatprep.subr.mxu0 0.0
      %961 = vmatpush2.msra.mxu0 0.0
      %962 = vmatprep.subr.mxu0 0.0
      %963 = vmatpush2.msra.mxu0 0.0
      %964 = vmatprep.subr.mxu0 0.0
      %965 = vmatpush2.msra.mxu0 0.0
      %966 = vmatprep.subr.mxu0 0.0
      %967 = vmatpush2.msra.mxu0 0.0
      %968 = vmatprep.subr.mxu0 0.0
      %969 = vmatpush2.msra.mxu0 0.0
      %970 = vmatprep.subr.mxu0 0.0
      %971 = vmatpush2.msra.mxu0 0.0
      %972 = vmatprep.subr.mxu0 0.0
      %973 = vmatpush2.msra.mxu0 0.0
      %974 = vmatprep.subr.mxu0 0.0
      %975 = vmatpush2.msra.mxu0 0.0
      %976 = vmatprep.subr.mxu0 0.0
      %977 = vmatpush2.msra.mxu0 0.0
      %978 = vmatprep.subr.mxu0 0.0
      %979 = vmatpush2.msra.mxu0 0.0
      %980 = vmatprep.subr.mxu0 0.0
      %981 = vmatpush2.msra.mxu0 0.0
      %982 = vmatprep.mubr.f32.mxu0 0.0
      %983 = vmatmul.mubr.f32.gmra.mxu0 %v916
      %v984 = vpop.f32.mrf.mxu0
      %v985 = vadd.f32 0.0, %v984
      %v986 = vpop.f32.mrf.mxu0
      %987 = vdwg.mxu0
      %v989 = vsel %vm75, %v911, 0
      %991 = vmatprep.subr.mxu0 0.0
      %992 = vmatpush1.msra.mxu0 0.0
      %993 = vmatprep.subr.mxu0 0.0
      %994 = vmatpush1.msra.mxu0 0.0
      %995 = vmatprep.subr.mxu0 0.0
      %996 = vmatpush1.msra.mxu0 0.0
      %997 = vmatprep.subr.mxu0 0.0
      %998 = vmatpush1.msra.mxu0 0.0
      %999 = vmatprep.subr.mxu0 0.0
      %1000 = vmatpush1.msra.mxu0 0.0
      %1001 = vmatprep.subr.mxu0 0.0
      %1002 = vmatpush1.msra.mxu0 0.0
      %1003 = vmatprep.subr.mxu0 0.0
      %1004 = vmatpush1.msra.mxu0 0.0
      %1005 = vmatprep.subr.mxu0 0.0
      %1006 = vmatpush1.msra.mxu0 0.0
      %1007 = vmatprep.subr.mxu0 0.0
      %1008 = vmatpush1.msra.mxu0 0.0
      %1009 = vmatprep.subr.mxu0 0.0
      %1010 = vmatpush1.msra.mxu0 0.0
      %1011 = vmatprep.subr.mxu0 0.0
      %1012 = vmatpush1.msra.mxu0 0.0
      %1013 = vmatprep.subr.mxu0 0.0
      %1014 = vmatpush1.msra.mxu0 0.0
      %1015 = vmatprep.subr.mxu0 0.0
      %1016 = vmatpush1.msra.mxu0 0.0
      %1017 = vmatprep.subr.mxu0 0.0
      %1018 = vmatpush1.msra.mxu0 0.0
      %1019 = vmatprep.subr.mxu0 0.0
      %1020 = vmatpush1.msra.mxu0 0.0
      %1021 = vmatprep.subr.mxu0 0.0
      %1022 = vmatpush1.msra.mxu0 %v58
      %1023 = vmatprep.subr.mxu0 0.0
      %1024 = vmatpush2.msra.mxu0 0.0
      %1025 = vmatprep.subr.mxu0 0.0
      %1026 = vmatpush2.msra.mxu0 0.0
      %1027 = vmatprep.subr.mxu0 0.0
      %1028 = vmatpush2.msra.mxu0 0.0
      %1029 = vmatprep.subr.mxu0 0.0
      %1030 = vmatpush2.msra.mxu0 0.0
      %1031 = vmatprep.subr.mxu0 0.0
      %1032 = vmatpush2.msra.mxu0 0.0
      %1033 = vmatprep.subr.mxu0 0.0
      %1034 = vmatpush2.msra.mxu0 0.0
      %1035 = vmatprep.subr.mxu0 0.0
      %1036 = vmatpush2.msra.mxu0 0.0
      %1037 = vmatprep.subr.mxu0 0.0
      %1038 = vmatpush2.msra.mxu0 0.0
      %1039 = vmatprep.subr.mxu0 0.0
      %1040 = vmatpush2.msra.mxu0 0.0
      %1041 = vmatprep.subr.mxu0 0.0
      %1042 = vmatpush2.msra.mxu0 0.0
      %1043 = vmatprep.subr.mxu0 0.0
      %1044 = vmatpush2.msra.mxu0 0.0
      %1045 = vmatprep.subr.mxu0 0.0
      %1046 = vmatpush2.msra.mxu0 0.0
      %1047 = vmatprep.subr.mxu0 0.0
      %1048 = vmatpush2.msra.mxu0 0.0
      %1049 = vmatprep.subr.mxu0 0.0
      %1050 = vmatpush2.msra.mxu0 0.0
      %1051 = vmatprep.subr.mxu0 0.0
      %1052 = vmatpush2.msra.mxu0 0.0
      %1053 = vmatprep.subr.mxu0 0.0
      %1054 = vmatpush2.msra.mxu0 0.0
      %1055 = vmatprep.mubr.f32.mxu0 0.0
      %1056 = vmatmul.mubr.f32.gmra.mxu0 %v989
      %v1057 = vpop.f32.mrf.mxu0
      %v1058 = vadd.f32 %v985, %v1057
      %v1059 = vpop.f32.mrf.mxu0
      %1060 = vdwg.mxu0
      %1061 = vrot.lane.b32.xlu0 %v321, 112
      %v1062 = vpop.permute.xlu0 %1061
      %v1064 = vadd.f32 %v1058, %v1062
      %v1066 = vlaneseq
      %v1067 = vshrl.u32 %v1066, 7
      %v1068 = vsub.s32 0, %v1067
      %v1069 = vrot.slane %v71, %v1068
      %v1071 = vadd.f32 %v1064, %v1069
      %v1072 = vxor.u32 %v1071, 2147483648
      %v1073 = vmul.f32 %v1072, 1.442695
      %v1074 = vpow.pop %v1073
      %v1075 = vadd.f32 %v1074, 1.0
      %v1076 = vrcp.pop %v1075
      %v1077 = vmul.f32 1.0, %v1076
      %v1078 = vtanh.pop %v1071
      %v1079 = vmul.f32 %v1077, %v246
      %1081 = vrot.lane.b32.xlu0 %v1078, 96
      %v1082 = vpop.permute.xlu0 %1081
      %v1084 = vmul.f32 %v1077, %v1082
      %1086 = vrot.lane.b32.xlu0 %v1084, 16
      %v1087 = vpop.permute.xlu0 %1086
      %v1089 = vadd.f32 %v1079, %v1087
      %v1090 = vtanh.pop %v1089
      %1092 = vrot.lane.b32.xlu0 %v1090, 32
      %v1093 = vpop.permute.xlu0 %1092
      %v1095 = vmul.f32 %v1077, %v1093
      %v1097 = vlaneseq
      %v1098 = vshrl.u32 %v1097, 7
      %v1099 = vsub.s32 0, %v1098
      %v1100 = vrot.slane %v74, %v1099
      %1103 = vrot.lane.b32.xlu0 %v1095, 80
      %v1104 = vpop.permute.xlu0 %1103
      %v1105 = vsel %vm251, %v1104, 0
      %1107 = vmatprep.subr.mxu0 0.0
      %1108 = vmatpush1.msra.mxu0 0.0
      %1109 = vmatprep.subr.mxu0 0.0
      %1110 = vmatpush1.msra.mxu0 0.0
      %1111 = vmatprep.subr.mxu0 0.0
      %1112 = vmatpush1.msra.mxu0 0.0
      %1113 = vmatprep.subr.mxu0 0.0
      %1114 = vmatpush1.msra.mxu0 0.0
      %1115 = vmatprep.subr.mxu0 0.0
      %1116 = vmatpush1.msra.mxu0 0.0
      %1117 = vmatprep.subr.mxu0 0.0
      %1118 = vmatpush1.msra.mxu0 0.0
      %1119 = vmatprep.subr.mxu0 0.0
      %1120 = vmatpush1.msra.mxu0 0.0
      %1121 = vmatprep.subr.mxu0 0.0
      %1122 = vmatpush1.msra.mxu0 0.0
      %1123 = vmatprep.subr.mxu0 0.0
      %1124 = vmatpush1.msra.mxu0 0.0
      %1125 = vmatprep.subr.mxu0 0.0
      %1126 = vmatpush1.msra.mxu0 0.0
      %1127 = vmatprep.subr.mxu0 0.0
      %1128 = vmatpush1.msra.mxu0 0.0
      %1129 = vmatprep.subr.mxu0 0.0
      %1130 = vmatpush1.msra.mxu0 0.0
      %1131 = vmatprep.subr.mxu0 0.0
      %1132 = vmatpush1.msra.mxu0 0.0
      %1133 = vmatprep.subr.mxu0 0.0
      %1134 = vmatpush1.msra.mxu0 0.0
      %1135 = vmatprep.subr.mxu0 0.0
      %1136 = vmatpush1.msra.mxu0 %v73
      %1137 = vmatprep.subr.mxu0 0.0
      %1138 = vmatpush1.msra.mxu0 %v72
      %1139 = vmatprep.subr.mxu0 0.0
      %1140 = vmatpush2.msra.mxu0 0.0
      %1141 = vmatprep.subr.mxu0 0.0
      %1142 = vmatpush2.msra.mxu0 0.0
      %1143 = vmatprep.subr.mxu0 0.0
      %1144 = vmatpush2.msra.mxu0 0.0
      %1145 = vmatprep.subr.mxu0 0.0
      %1146 = vmatpush2.msra.mxu0 0.0
      %1147 = vmatprep.subr.mxu0 0.0
      %1148 = vmatpush2.msra.mxu0 0.0
      %1149 = vmatprep.subr.mxu0 0.0
      %1150 = vmatpush2.msra.mxu0 0.0
      %1151 = vmatprep.subr.mxu0 0.0
      %1152 = vmatpush2.msra.mxu0 0.0
      %1153 = vmatprep.subr.mxu0 0.0
      %1154 = vmatpush2.msra.mxu0 0.0
      %1155 = vmatprep.subr.mxu0 0.0
      %1156 = vmatpush2.msra.mxu0 0.0
      %1157 = vmatprep.subr.mxu0 0.0
      %1158 = vmatpush2.msra.mxu0 0.0
      %1159 = vmatprep.subr.mxu0 0.0
      %1160 = vmatpush2.msra.mxu0 0.0
      %1161 = vmatprep.subr.mxu0 0.0
      %1162 = vmatpush2.msra.mxu0 0.0
      %1163 = vmatprep.subr.mxu0 0.0
      %1164 = vmatpush2.msra.mxu0 0.0
      %1165 = vmatprep.subr.mxu0 0.0
      %1166 = vmatpush2.msra.mxu0 0.0
      %1167 = vmatprep.subr.mxu0 0.0
      %1168 = vmatpush2.msra.mxu0 0.0
      %1169 = vmatprep.subr.mxu0 0.0
      %1170 = vmatpush2.msra.mxu0 0.0
      %1171 = vmatprep.mubr.f32.mxu0 0.0
      %1172 = vmatmul.mubr.f32.gmra.mxu0 %v1105
      %v1173 = vpop.f32.mrf.mxu0
      %v1174 = vadd.f32 %v1100, %v1173
      %v1175 = vpop.f32.mrf.mxu0
      %1176 = vdwg.mxu0
      %s1177 = smul.u32 %s239, 2
      %s1178 = scalar_lea.vmem %s14, %s1177
      %vm1179 = vcmask 58368
      %1180 = vst.msk [vmem:[%s1178] sm:$0x3] %vm1179, %v1174
      %v1181 = vsel %vm643, %v834, %v745
      %s1183 = scalar_lea.vmem [#allocation3], %s1177
      %1184 = vst.msk [vmem:[%s1183] sm:$0x3] %vm646, %v1181
      %v1185 = vsel %vm1179, %v1174, -inf
      %1186 = vmax.xlane.f32.xlu0 %v1185
      %v1187 = vpop.xlane.xlu0 %1186
      %vm1188 = vcmp.eq.f32.partialorder %v1174, %v1187
      %v1189 = vsel %vm1188, %v622, 8
      %v1190 = vsel %vm1179, %v1189, 2147483647
      %v1191 = vand.u32 %v1190, 65535
      %v1192 = vshra.s32 %v1190, 16
      %v1193 = vcvt.s32.f32 %v1191
      %v1194 = vcvt.s32.f32 %v1192
      %1195 = vmin.xlane.f32.xlu0 %v1194
      %v1196 = vpop.xlane.xlu0 %1195
      %vm1197 = vcmp.eq.f32.partialorder %v1194, %v1196
      %v1198 = vsel %vm1197, %v1193, inf
      %1199 = vmin.xlane.f32.xlu0 %v1198
      %v1200 = vpop.xlane.xlu0 %1199
      %v1201 = vcvt.f32.s32 %v1200
      %v1202 = vcvt.f32.s32 %v1196
      %v1203 = vshll.u32 %v1202, 16
      %v1204 = vadd.s32 %v1203, %v1201
    $region62: #{tpu_custom_call.1} parent=1 // loop_footer
      %s243 = sadd.s32 1, %s239
    $region63: #{tpu_custom_call.1} parent=1 // loop_footer_branch
      %238 = sbr.rel target = $region59
    $region64: #{tpu_custom_call.1} parent=1 // loop_exit
      _
    // Predicated region
    $region65: #{tpu_custom_call.1} parent=1 // pred_check
      _
    $region66: #{tpu_custom_call.1} parent=1 // pred_check_branch
      %1206 = sbr.rel (0) target = $region68
    $region67: #{tpu_custom_call.1} parent=1 // pred_region
      _
    $region68: #{tpu_custom_call.1} parent=1 // pred_fallthru
      _
    // Predicated region
    $region69: #{tpu_custom_call.1} parent=1 // pred_check
      _
    $region70: #{tpu_custom_call.1} parent=1 // pred_check_branch
      %1208 = sbr.rel (0) target = $region72
    $region71: #{tpu_custom_call.1} parent=1 // pred_region
      %s1210 = ssub.s32 512, 512
      %1211 = vsyncadd [#allocation4], %s1210
      %s1212 = sshll.u32 [#allocation3], 4
      %s1213 = int_to_ptr.vmem [resolvable:$true] %s1212
      %1218 = dma.vmem_to_hbm [thread:$0]  %s1213, 512, %s15, [#allocation4], 32, 32, 2
    $region72: #{tpu_custom_call.1} parent=1 // pred_fallthru
      _
    // Predicated region
    $region73: #{tpu_custom_call.1} parent=1 // pred_check
      _
    $region74: #{tpu_custom_call.1} parent=1 // pred_check_branch
      %1220 = sbr.rel (0) target = $region76
    $region75: #{tpu_custom_call.1} parent=1 // pred_region
      _
    $region76: #{tpu_custom_call.1} parent=1 // pred_fallthru
      _
    // Predicated region
    $region77: #{tpu_custom_call.1} parent=1 // pred_check
      _
    $region78: #{tpu_custom_call.1} parent=1 // pred_check_branch
      %1222 = sbr.rel (0) target = $region80
    $region79: #{tpu_custom_call.1} parent=1 // pred_region
      %1223 = dma.done [#allocation4], 512
    $region80: #{tpu_custom_call.1} parent=1 // pred_fallthru
      _
    %1224 = vsyncpa [#allocation4], 1

</llo_original>
